<compile_context>
chip_gen: v5e
topology: v5e:2x2
jax: 0.10.0
libtpu: 0.0.40
codegen_flags: <defaults>
</compile_context>

<pallas_src>
import math
import jax
import jax.numpy as jnp
from jax.experimental import pallas as pl
from jax.experimental.pallas import tpu as pltpu

DT = 1.0
TAU_M = 10.0
LM = math.exp(-DT / TAU_M)  # leak factor lm = exp(-dt/tau_m)


def _round_up(x, m):
    return ((x + m - 1) // m) * m


def _make_rnn_kernel(tc, lm, unroll):
    """Kernel closure: one grid step == `tc` RNN time steps for one batch block."""

    def kernel(x_ref, win_t_ref, wr_t_ref, wout_t_ref, rout_ref, mem_ref):
        # Reset the carried membrane potential at the start of each batch
        # block (time is grid axis 1 -> sequential / "arbitrary").
        @pl.when(pl.program_id(1) == 0)
        def _init():
            mem_ref[...] = jnp.zeros_like(mem_ref)

        mem0 = mem_ref[...]                              # (bb, Hp) f32
        r0 = jnp.tanh(mem0)                              # tanh(mem_{t-1}) carry

        def step(t, carry):
            mem, r_prev = carry
            # Fused input projection (independent of the recurrence carry;
            # (1-lm) already folded into win_t in the wrapper).
            u_t = jnp.dot(x_ref[t], win_t_ref[...],
                          preferred_element_type=jnp.float32)
            # Recurrent term -- the serial critical path: bf16 MXU operands,
            # f32 accumulation, (1-lm) folded into wr_t.
            rec = jnp.dot(r_prev.astype(wr_t_ref.dtype), wr_t_ref[...],
                          preferred_element_type=jnp.float32)
            mem = lm * mem + u_t + rec                   # (bb, Hp) f32
            r_t = jnp.tanh(mem)
            # Fused output projection; lane-dense (bb, Op) store per step.
            rout_ref[t] = jnp.dot(r_t, wout_t_ref[...],
                                  preferred_element_type=jnp.float32)
            return (mem, r_t)

        mem_f, _ = jax.lax.fori_loop(0, tc, step, (mem0, r0), unroll=unroll)
        mem_ref[...] = mem_f                             # persist across chunks

    return kernel


def rate_rnn_mante_forward(inputs, Win, Wout, pin, pout, l, *, tc=None, b_block=None):
    """Pallas forward (mdl=1).  inputs: (T, B, I, 1) -> returns (T, B, O, 1)."""
    T, B, I, _ = inputs.shape
    H = Win.shape[0]
    O = Wout.shape[0]
    f32 = jnp.float32

    x = inputs[..., 0].astype(f32)                       # (T, B, I)
    Win = Win.astype(f32)
    Wout = Wout.astype(f32)
    pin = pin.astype(f32)
    pout = pout.astype(f32)
    l = l.astype(f32)

    one_minus_lm = 1.0 - LM
    # Wr = (l*pin) @ pout^T  ->  Wr^T = (pout*l) @ pin^T.  Fold (1-lm) once
    # into both projections; store the recurrent weight in bf16 (MXU-native).
    wr_t = (one_minus_lm * jnp.dot(pout * l[None, :], pin.T)).astype(jnp.bfloat16)
    win_t = one_minus_lm * Win.T                          # (I, H) f32
    wout_t = Wout.T                                       # (H, O) f32

    # Hardware-friendly padding: padded rows/cols stay exactly zero through
    # the recurrence (zero weights / zero inputs / tanh(0)=0).
    Bp = _round_up(B, 8)
    Hp = _round_up(H, 128)
    Ip = _round_up(I, 8)
    Op = _round_up(O, 128)                                # lane-dense output stores

    if b_block is None:
        bb = Bp                                           # one batch block
    else:
        bb = _round_up(min(b_block, Bp), 8)
        Bp = _round_up(Bp, bb)

    # Time chunk: amortize per-grid-step overhead, bounded by a VMEM budget.
    if tc is None:
        per_t = bb * 2 * (Ip + Op) * 4                    # double-buffered x + rout
        tc = int(max(1, min(128, T, (6 << 20) // max(per_t, 1))))
    tc = int(max(1, min(tc, T)))
    Tp = _round_up(T, tc)
    unroll = tc if tc <= 8 else 4                         # partial unroll (serial dep)

    x_p = jnp.zeros((Tp, Bp, Ip), f32).at[:T, :B, :I].set(x)
    win_t_p = jnp.zeros((Ip, Hp), f32).at[:I, :H].set(win_t)
    wr_t_p = jnp.zeros((Hp, Hp), jnp.bfloat16).at[:H, :H].set(wr_t)
    wout_t_p = jnp.zeros((Hp, Op), f32).at[:H, :O].set(wout_t)

    # Explicit VMEM budget with headroom (v7x: 64 MiB physical).
    blk_bytes = tc * bb * (Ip + Op) * 4
    w_bytes = Ip * Hp * 4 + Hp * Hp * 2 + Hp * Op * 4
    scratch_bytes = bb * Hp * 4
    needed = 2 * (blk_bytes + w_bytes) + scratch_bytes
    vmem_limit = int(min(max(2 * needed, 32 << 20), 64 << 20))

    kernel = _make_rnn_kernel(tc, LM, unroll)
    rout = pl.pallas_call(
        kernel,
        out_shape=jax.ShapeDtypeStruct((Tp, Bp, Op), f32),
        grid_spec=pltpu.PrefetchScalarGridSpec(
            num_scalar_prefetch=0,
            grid=(Bp // bb, Tp // tc),                    # (batch blocks, time chunks)
            in_specs=[
                pl.BlockSpec((tc, bb, Ip), lambda b, c: (c, b, 0)),  # raw x chunk
                pl.BlockSpec((Ip, Hp), lambda b, c: (0, 0)),         # (1-lm)*Win^T
                pl.BlockSpec((Hp, Hp), lambda b, c: (0, 0)),         # (1-lm)*Wr^T bf16
                pl.BlockSpec((Hp, Op), lambda b, c: (0, 0)),         # Wout^T
            ],
            out_specs=pl.BlockSpec((tc, bb, Op), lambda b, c: (c, b, 0)),
            scratch_shapes=[
                pltpu.VMEM((bb, Hp), f32),                # mem (persists over chunks)
            ],
        ),
        compiler_params=pltpu.CompilerParams(
            dimension_semantics=("parallel", "arbitrary"),  # batch ||, time serial
            vmem_limit_bytes=vmem_limit,
        ),
    )(x_p, win_t_p, wr_t_p, wout_t_p)

    # TODO(synk): for very large H, give the constant weight BlockSpecs
    # pipeline_mode=pl.Buffered(1) (or DMA them once into scratch) to avoid
    # double-buffering ~Hp*Hp weights in VMEM.
    return rout[:T, :B, :O][..., None]                    # (T, B, O, 1)


def reference_forward(inputs, Win, Wout, pin, pout, l):
    """Pure-JAX f32 replica of the PyTorch forward (mdl=1)."""
    Wr = jnp.matmul(pin * l, pout.T)                      # (H, H)
    T, B, _, _ = inputs.shape
    H = Win.shape[0]
    mem = jnp.zeros((B, H, 1), jnp.float32)
    R = []
    for t in range(T):
        I_t = jnp.matmul(Win, inputs[t]) + jnp.matmul(Wr, jnp.tanh(mem))
        mem = LM * mem + (1.0 - LM) * I_t
        R.append(jnp.tanh(mem))
    R = jnp.stack(R, 0)                                   # (T, B, H, 1)
    return jnp.matmul(Wout, R)                            # (T, B, O, 1)


if __name__ == "__main__":
    # Small shapes consistent with the module: time-major sequence input.
    T, B = 8, 2            # time steps, batch
    I, H, O, P = 4, 32, 2, 4

    key = jax.random.PRNGKey(0)
    k = jax.random.split(key, 6)
    # Deterministic init following rate_RNN_mante.initialize() stddevs.
    Win = jax.random.normal(k[0], (H, I), jnp.float32) / jnp.sqrt(I * 1.0)
    Wout = jax.random.normal(k[1], (O, H), jnp.float32) / jnp.sqrt(H * 1.0)
    pin = jax.random.normal(k[2], (H, P), jnp.float32) / jnp.sqrt(P * 1.0)
    pout = jax.random.normal(k[3], (H, P), jnp.float32) / jnp.sqrt(P * 1.0)
    l = jax.random.normal(k[4], (P,), jnp.float32) * jnp.sqrt(P * 1.0) / jnp.sqrt(H * 1.0)
    inputs = jax.random.normal(k[5], (T, B, I, 1), jnp.float32)

    rout = rate_rnn_mante_forward(inputs, Win, Wout, pin, pout, l)
    rout = jax.block_until_ready(rout)

    ref = reference_forward(inputs, Win, Wout, pin, pout, l)
    assert rout.shape == (T, B, O, 1), rout.shape
    err = float(jnp.max(jnp.abs(rout - ref)))
    # Tolerance loosened vs pure-f32 because the recurrent matmul uses bf16
    # operands (f32 accumulation, f32 state) per the perf review.
    assert err < 2e-2, err

    print("KERNEL_OK")
</pallas_src>

<mosaic_0001>
module attributes {stable_mosaic.version = 11 : i64} {
  func.func @kernel(%arg0: i32, %arg1: i32, %arg2: memref<8x8x8xf32, #tpu.memory_space<vmem>>, %arg3: memref<8x128xf32, #tpu.memory_space<vmem>>, %arg4: memref<128x128xbf16, #tpu.memory_space<vmem>>, %arg5: memref<128x128xf32, #tpu.memory_space<vmem>>, %arg6: memref<8x8x128xf32, #tpu.memory_space<vmem>>, %arg7: memref<8x128xf32, #tpu.memory_space<vmem>>) attributes {dimension_semantics = [#tpu.dimension_semantics<parallel>, #tpu.dimension_semantics<arbitrary>], iteration_bounds = array<i64: 1, 1>, scalar_prefetch = 0 : i64, scratch_operands = 1 : i64, tpu.core_type = #tpu.core_type<tc>, window_params = [{transform_indices = @transform_0, window_bounds = array<i64: 8, 8, 8>}, {pipeline_mode = #tpu.pipeline_mode<synchronous>, transform_indices = @transform_1, window_bounds = array<i64: 8, 128>}, {pipeline_mode = #tpu.pipeline_mode<synchronous>, transform_indices = @transform_2, window_bounds = array<i64: 128, 128>}, {pipeline_mode = #tpu.pipeline_mode<synchronous>, transform_indices = @transform_3, window_bounds = array<i64: 128, 128>}, {transform_indices = @transform_4, window_bounds = array<i64: 8, 8, 128>}]} {
    %c0_i32 = arith.constant 0 : i32
    %0 = arith.cmpi eq, %arg1, %c0_i32 : i32
    %1 = arith.extui %0 : i1 to i32
    %c0_i32_0 = arith.constant 0 : i32
    %2 = arith.cmpi ne, %1, %c0_i32_0 : i32
    scf.if %2 {
      %cst_116 = arith.constant 0.000000e+00 : f32
      %158 = vector.broadcast %cst_116 : f32 to vector<8x128xf32>
      %c0_117 = arith.constant 0 : index
      %c0_118 = arith.constant 0 : index
      %159 = vector.load %arg7[%c0_117, %c0_118] : memref<8x128xf32, #tpu.memory_space<vmem>>, vector<8x128xf32>
      tpu.vector_store %arg7[%c0_117, %c0_118], %158 {strides = array<i32>} : memref<8x128xf32, #tpu.memory_space<vmem>>, vector<8x128xf32>,
    } else {
    }
    %c0 = arith.constant 0 : index
    %c0_1 = arith.constant 0 : index
    %3 = vector.load %arg7[%c0, %c0_1] : memref<8x128xf32, #tpu.memory_space<vmem>>, vector<8x128xf32>
    %4 = math.tanh %3 : vector<8x128xf32>
    %c0_i32_2 = arith.constant 0 : i32
    %5 = arith.index_cast %c0_i32_2 : i32 to index
    %c0_3 = arith.constant 0 : index
    %c0_4 = arith.constant 0 : index
    %6 = vector.load %arg2[%5, %c0_3, %c0_4] : memref<8x8x8xf32, #tpu.memory_space<vmem>>, vector<1x8x8xf32>
    %7 = vector.shape_cast %6 : vector<1x8x8xf32> to vector<8x8xf32>
    %c0_5 = arith.constant 0 : index
    %c0_6 = arith.constant 0 : index
    %8 = vector.load %arg3[%c0_5, %c0_6] : memref<8x128xf32, #tpu.memory_space<vmem>>, vector<8x128xf32>
    %cst = arith.constant dense<0.000000e+00> : vector<8x128xf32>
    %9 = tpu.matmul %7, %8, %cst {dimension_numbers = #tpu.dot_dimension_numbers<[1], [0], [0], [1], [0, 0, 1, 1], [], []>} : vector<8x8xf32>, vector<8x128xf32>, vector<8x128xf32> -> vector<8x128xf32>
    %10 = arith.truncf %4 : vector<8x128xf32> to vector<8x128xbf16>
    %c0_7 = arith.constant 0 : index
    %c0_8 = arith.constant 0 : index
    %11 = vector.load %arg4[%c0_7, %c0_8] : memref<128x128xbf16, #tpu.memory_space<vmem>>, vector<128x128xbf16>
    %cst_9 = arith.constant dense<0.000000e+00> : vector<8x128xf32>
    %12 = tpu.matmul %10, %11, %cst_9 {dimension_numbers = #tpu.dot_dimension_numbers<[1], [0], [0], [1], [0, 0, 1, 1], [], []>} : vector<8x128xbf16>, vector<128x128xbf16>, vector<8x128xf32> -> vector<8x128xf32>
    %cst_10 = arith.constant 0.904837429 : f32
    %13 = vector.broadcast %cst_10 : f32 to vector<8x128xf32>
    %14 = arith.mulf %13, %3 : vector<8x128xf32>
    %15 = arith.addf %14, %9 : vector<8x128xf32>
    %16 = arith.addf %15, %12 : vector<8x128xf32>
    %17 = math.tanh %16 : vector<8x128xf32>
    %c0_11 = arith.constant 0 : index
    %c0_12 = arith.constant 0 : index
    %18 = vector.load %arg5[%c0_11, %c0_12] : memref<128x128xf32, #tpu.memory_space<vmem>>, vector<128x128xf32>
    %cst_13 = arith.constant dense<0.000000e+00> : vector<8x128xf32>
    %19 = tpu.matmul %17, %18, %cst_13 {dimension_numbers = #tpu.dot_dimension_numbers<[1], [0], [0], [1], [0, 0, 1, 1], [], []>} : vector<8x128xf32>, vector<128x128xf32>, vector<8x128xf32> -> vector<8x128xf32>
    %20 = arith.index_cast %c0_i32_2 : i32 to index
    %c0_14 = arith.constant 0 : index
    %c0_15 = arith.constant 0 : index
    %21 = vector.load %arg6[%20, %c0_14, %c0_15] : memref<8x8x128xf32, #tpu.memory_space<vmem>>, vector<1x8x128xf32>
    %22 = vector.shape_cast %21 : vector<1x8x128xf32> to vector<8x128xf32>
    %23 = vector.shape_cast %19 : vector<8x128xf32> to vector<1x8x128xf32>
    tpu.vector_store %arg6[%20, %c0_14, %c0_15], %23 {strides = array<i32>} : memref<8x8x128xf32, #tpu.memory_space<vmem>>, vector<1x8x128xf32>,
    %c1_i32 = arith.constant 1 : i32
    %24 = arith.index_cast %c1_i32 : i32 to index
    %c0_16 = arith.constant 0 : index
    %c0_17 = arith.constant 0 : index
    %25 = vector.load %arg2[%24, %c0_16, %c0_17] : memref<8x8x8xf32, #tpu.memory_space<vmem>>, vector<1x8x8xf32>
    %26 = vector.shape_cast %25 : vector<1x8x8xf32> to vector<8x8xf32>
    %c0_18 = arith.constant 0 : index
    %c0_19 = arith.constant 0 : index
    %27 = vector.load %arg3[%c0_18, %c0_19] : memref<8x128xf32, #tpu.memory_space<vmem>>, vector<8x128xf32>
    %cst_20 = arith.constant dense<0.000000e+00> : vector<8x128xf32>
    %28 = tpu.matmul %26, %27, %cst_20 {dimension_numbers = #tpu.dot_dimension_numbers<[1], [0], [0], [1], [0, 0, 1, 1], [], []>} : vector<8x8xf32>, vector<8x128xf32>, vector<8x128xf32> -> vector<8x128xf32>
    %29 = arith.truncf %17 : vector<8x128xf32> to vector<8x128xbf16>
    %c0_21 = arith.constant 0 : index
    %c0_22 = arith.constant 0 : index
    %30 = vector.load %arg4[%c0_21, %c0_22] : memref<128x128xbf16, #tpu.memory_space<vmem>>, vector<128x128xbf16>
    %cst_23 = arith.constant dense<0.000000e+00> : vector<8x128xf32>
    %31 = tpu.matmul %29, %30, %cst_23 {dimension_numbers = #tpu.dot_dimension_numbers<[1], [0], [0], [1], [0, 0, 1, 1], [], []>} : vector<8x128xbf16>, vector<128x128xbf16>, vector<8x128xf32> -> vector<8x128xf32>
    %cst_24 = arith.constant 0.904837429 : f32
    %32 = vector.broadcast %cst_24 : f32 to vector<8x128xf32>
    %33 = arith.mulf %32, %16 : vector<8x128xf32>
    %34 = arith.addf %33, %28 : vector<8x128xf32>
    %35 = arith.addf %34, %31 : vector<8x128xf32>
    %36 = math.tanh %35 : vector<8x128xf32>
    %c0_25 = arith.constant 0 : index
    %c0_26 = arith.constant 0 : index
    %37 = vector.load %arg5[%c0_25, %c0_26] : memref<128x128xf32, #tpu.memory_space<vmem>>, vector<128x128xf32>
    %cst_27 = arith.constant dense<0.000000e+00> : vector<8x128xf32>
    %38 = tpu.matmul %36, %37, %cst_27 {dimension_numbers = #tpu.dot_dimension_numbers<[1], [0], [0], [1], [0, 0, 1, 1], [], []>} : vector<8x128xf32>, vector<128x128xf32>, vector<8x128xf32> -> vector<8x128xf32>
    %39 = arith.index_cast %c1_i32 : i32 to index
    %c0_28 = arith.constant 0 : index
    %c0_29 = arith.constant 0 : index
    %40 = vector.load %arg6[%39, %c0_28, %c0_29] : memref<8x8x128xf32, #tpu.memory_space<vmem>>, vector<1x8x128xf32>
    %41 = vector.shape_cast %40 : vector<1x8x128xf32> to vector<8x128xf32>
    %42 = vector.shape_cast %38 : vector<8x128xf32> to vector<1x8x128xf32>
    tpu.vector_store %arg6[%39, %c0_28, %c0_29], %42 {strides = array<i32>} : memref<8x8x128xf32, #tpu.memory_space<vmem>>, vector<1x8x128xf32>,
    %c2_i32 = arith.constant 2 : i32
    %43 = arith.index_cast %c2_i32 : i32 to index
    %c0_30 = arith.constant 0 : index
    %c0_31 = arith.constant 0 : index
    %44 = vector.load %arg2[%43, %c0_30, %c0_31] : memref<8x8x8xf32, #tpu.memory_space<vmem>>, vector<1x8x8xf32>
    %45 = vector.shape_cast %44 : vector<1x8x8xf32> to vector<8x8xf32>
    %c0_32 = arith.constant 0 : index
    %c0_33 = arith.constant 0 : index
    %46 = vector.load %arg3[%c0_32, %c0_33] : memref<8x128xf32, #tpu.memory_space<vmem>>, vector<8x128xf32>
    %cst_34 = arith.constant dense<0.000000e+00> : vector<8x128xf32>
    %47 = tpu.matmul %45, %46, %cst_34 {dimension_numbers = #tpu.dot_dimension_numbers<[1], [0], [0], [1], [0, 0, 1, 1], [], []>} : vector<8x8xf32>, vector<8x128xf32>, vector<8x128xf32> -> vector<8x128xf32>
    %48 = arith.truncf %36 : vector<8x128xf32> to vector<8x128xbf16>
    %c0_35 = arith.constant 0 : index
    %c0_36 = arith.constant 0 : index
    %49 = vector.load %arg4[%c0_35, %c0_36] : memref<128x128xbf16, #tpu.memory_space<vmem>>, vector<128x128xbf16>
    %cst_37 = arith.constant dense<0.000000e+00> : vector<8x128xf32>
    %50 = tpu.matmul %48, %49, %cst_37 {dimension_numbers = #tpu.dot_dimension_numbers<[1], [0], [0], [1], [0, 0, 1, 1], [], []>} : vector<8x128xbf16>, vector<128x128xbf16>, vector<8x128xf32> -> vector<8x128xf32>
    %cst_38 = arith.constant 0.904837429 : f32
    %51 = vector.broadcast %cst_38 : f32 to vector<8x128xf32>
    %52 = arith.mulf %51, %35 : vector<8x128xf32>
    %53 = arith.addf %52, %47 : vector<8x128xf32>
    %54 = arith.addf %53, %50 : vector<8x128xf32>
    %55 = math.tanh %54 : vector<8x128xf32>
    %c0_39 = arith.constant 0 : index
    %c0_40 = arith.constant 0 : index
    %56 = vector.load %arg5[%c0_39, %c0_40] : memref<128x128xf32, #tpu.memory_space<vmem>>, vector<128x128xf32>
    %cst_41 = arith.constant dense<0.000000e+00> : vector<8x128xf32>
    %57 = tpu.matmul %55, %56, %cst_41 {dimension_numbers = #tpu.dot_dimension_numbers<[1], [0], [0], [1], [0, 0, 1, 1], [], []>} : vector<8x128xf32>, vector<128x128xf32>, vector<8x128xf32> -> vector<8x128xf32>
    %58 = arith.index_cast %c2_i32 : i32 to index
    %c0_42 = arith.constant 0 : index
    %c0_43 = arith.constant 0 : index
    %59 = vector.load %arg6[%58, %c0_42, %c0_43] : memref<8x8x128xf32, #tpu.memory_space<vmem>>, vector<1x8x128xf32>
    %60 = vector.shape_cast %59 : vector<1x8x128xf32> to vector<8x128xf32>
    %61 = vector.shape_cast %57 : vector<8x128xf32> to vector<1x8x128xf32>
    tpu.vector_store %arg6[%58, %c0_42, %c0_43], %61 {strides = array<i32>} : memref<8x8x128xf32, #tpu.memory_space<vmem>>, vector<1x8x128xf32>,
    %c3_i32 = arith.constant 3 : i32
    %62 = arith.index_cast %c3_i32 : i32 to index
    %c0_44 = arith.constant 0 : index
    %c0_45 = arith.constant 0 : index
    %63 = vector.load %arg2[%62, %c0_44, %c0_45] : memref<8x8x8xf32, #tpu.memory_space<vmem>>, vector<1x8x8xf32>
    %64 = vector.shape_cast %63 : vector<1x8x8xf32> to vector<8x8xf32>
    %c0_46 = arith.constant 0 : index
    %c0_47 = arith.constant 0 : index
    %65 = vector.load %arg3[%c0_46, %c0_47] : memref<8x128xf32, #tpu.memory_space<vmem>>, vector<8x128xf32>
    %cst_48 = arith.constant dense<0.000000e+00> : vector<8x128xf32>
    %66 = tpu.matmul %64, %65, %cst_48 {dimension_numbers = #tpu.dot_dimension_numbers<[1], [0], [0], [1], [0, 0, 1, 1], [], []>} : vector<8x8xf32>, vector<8x128xf32>, vector<8x128xf32> -> vector<8x128xf32>
    %67 = arith.truncf %55 : vector<8x128xf32> to vector<8x128xbf16>
    %c0_49 = arith.constant 0 : index
    %c0_50 = arith.constant 0 : index
    %68 = vector.load %arg4[%c0_49, %c0_50] : memref<128x128xbf16, #tpu.memory_space<vmem>>, vector<128x128xbf16>
    %cst_51 = arith.constant dense<0.000000e+00> : vector<8x128xf32>
    %69 = tpu.matmul %67, %68, %cst_51 {dimension_numbers = #tpu.dot_dimension_numbers<[1], [0], [0], [1], [0, 0, 1, 1], [], []>} : vector<8x128xbf16>, vector<128x128xbf16>, vector<8x128xf32> -> vector<8x128xf32>
    %cst_52 = arith.constant 0.904837429 : f32
    %70 = vector.broadcast %cst_52 : f32 to vector<8x128xf32>
    %71 = arith.mulf %70, %54 : vector<8x128xf32>
    %72 = arith.addf %71, %66 : vector<8x128xf32>
    %73 = arith.addf %72, %69 : vector<8x128xf32>
    %74 = math.tanh %73 : vector<8x128xf32>
    %c0_53 = arith.constant 0 : index
    %c0_54 = arith.constant 0 : index
    %75 = vector.load %arg5[%c0_53, %c0_54] : memref<128x128xf32, #tpu.memory_space<vmem>>, vector<128x128xf32>
    %cst_55 = arith.constant dense<0.000000e+00> : vector<8x128xf32>
    %76 = tpu.matmul %74, %75, %cst_55 {dimension_numbers = #tpu.dot_dimension_numbers<[1], [0], [0], [1], [0, 0, 1, 1], [], []>} : vector<8x128xf32>, vector<128x128xf32>, vector<8x128xf32> -> vector<8x128xf32>
    %77 = arith.index_cast %c3_i32 : i32 to index
    %c0_56 = arith.constant 0 : index
    %c0_57 = arith.constant 0 : index
    %78 = vector.load %arg6[%77, %c0_56, %c0_57] : memref<8x8x128xf32, #tpu.memory_space<vmem>>, vector<1x8x128xf32>
    %79 = vector.shape_cast %78 : vector<1x8x128xf32> to vector<8x128xf32>
    %80 = vector.shape_cast %76 : vector<8x128xf32> to vector<1x8x128xf32>
    tpu.vector_store %arg6[%77, %c0_56, %c0_57], %80 {strides = array<i32>} : memref<8x8x128xf32, #tpu.memory_space<vmem>>, vector<1x8x128xf32>,
    %c4_i32 = arith.constant 4 : i32
    %81 = arith.index_cast %c4_i32 : i32 to index
    %c0_58 = arith.constant 0 : index
    %c0_59 = arith.constant 0 : index
    %82 = vector.load %arg2[%81, %c0_58, %c0_59] : memref<8x8x8xf32, #tpu.memory_space<vmem>>, vector<1x8x8xf32>
    %83 = vector.shape_cast %82 : vector<1x8x8xf32> to vector<8x8xf32>
    %c0_60 = arith.constant 0 : index
    %c0_61 = arith.constant 0 : index
    %84 = vector.load %arg3[%c0_60, %c0_61] : memref<8x128xf32, #tpu.memory_space<vmem>>, vector<8x128xf32>
    %cst_62 = arith.constant dense<0.000000e+00> : vector<8x128xf32>
    %85 = tpu.matmul %83, %84, %cst_62 {dimension_numbers = #tpu.dot_dimension_numbers<[1], [0], [0], [1], [0, 0, 1, 1], [], []>} : vector<8x8xf32>, vector<8x128xf32>, vector<8x128xf32> -> vector<8x128xf32>
    %86 = arith.truncf %74 : vector<8x128xf32> to vector<8x128xbf16>
    %c0_63 = arith.constant 0 : index
    %c0_64 = arith.constant 0 : index
    %87 = vector.load %arg4[%c0_63, %c0_64] : memref<128x128xbf16, #tpu.memory_space<vmem>>, vector<128x128xbf16>
    %cst_65 = arith.constant dense<0.000000e+00> : vector<8x128xf32>
    %88 = tpu.matmul %86, %87, %cst_65 {dimension_numbers = #tpu.dot_dimension_numbers<[1], [0], [0], [1], [0, 0, 1, 1], [], []>} : vector<8x128xbf16>, vector<128x128xbf16>, vector<8x128xf32> -> vector<8x128xf32>
    %cst_66 = arith.constant 0.904837429 : f32
    %89 = vector.broadcast %cst_66 : f32 to vector<8x128xf32>
    %90 = arith.mulf %89, %73 : vector<8x128xf32>
    %91 = arith.addf %90, %85 : vector<8x128xf32>
    %92 = arith.addf %91, %88 : vector<8x128xf32>
    %93 = math.tanh %92 : vector<8x128xf32>
    %c0_67 = arith.constant 0 : index
    %c0_68 = arith.constant 0 : index
    %94 = vector.load %arg5[%c0_67, %c0_68] : memref<128x128xf32, #tpu.memory_space<vmem>>, vector<128x128xf32>
    %cst_69 = arith.constant dense<0.000000e+00> : vector<8x128xf32>
    %95 = tpu.matmul %93, %94, %cst_69 {dimension_numbers = #tpu.dot_dimension_numbers<[1], [0], [0], [1], [0, 0, 1, 1], [], []>} : vector<8x128xf32>, vector<128x128xf32>, vector<8x128xf32> -> vector<8x128xf32>
    %96 = arith.index_cast %c4_i32 : i32 to index
    %c0_70 = arith.constant 0 : index
    %c0_71 = arith.constant 0 : index
    %97 = vector.load %arg6[%96, %c0_70, %c0_71] : memref<8x8x128xf32, #tpu.memory_space<vmem>>, vector<1x8x128xf32>
    %98 = vector.shape_cast %97 : vector<1x8x128xf32> to vector<8x128xf32>
    %99 = vector.shape_cast %95 : vector<8x128xf32> to vector<1x8x128xf32>
    tpu.vector_store %arg6[%96, %c0_70, %c0_71], %99 {strides = array<i32>} : memref<8x8x128xf32, #tpu.memory_space<vmem>>, vector<1x8x128xf32>,
    %c5_i32 = arith.constant 5 : i32
    %100 = arith.index_cast %c5_i32 : i32 to index
    %c0_72 = arith.constant 0 : index
    %c0_73 = arith.constant 0 : index
    %101 = vector.load %arg2[%100, %c0_72, %c0_73] : memref<8x8x8xf32, #tpu.memory_space<vmem>>, vector<1x8x8xf32>
    %102 = vector.shape_cast %101 : vector<1x8x8xf32> to vector<8x8xf32>
    %c0_74 = arith.constant 0 : index
    %c0_75 = arith.constant 0 : index
    %103 = vector.load %arg3[%c0_74, %c0_75] : memref<8x128xf32, #tpu.memory_space<vmem>>, vector<8x128xf32>
    %cst_76 = arith.constant dense<0.000000e+00> : vector<8x128xf32>
    %104 = tpu.matmul %102, %103, %cst_76 {dimension_numbers = #tpu.dot_dimension_numbers<[1], [0], [0], [1], [0, 0, 1, 1], [], []>} : vector<8x8xf32>, vector<8x128xf32>, vector<8x128xf32> -> vector<8x128xf32>
    %105 = arith.truncf %93 : vector<8x128xf32> to vector<8x128xbf16>
    %c0_77 = arith.constant 0 : index
    %c0_78 = arith.constant 0 : index
    %106 = vector.load %arg4[%c0_77, %c0_78] : memref<128x128xbf16, #tpu.memory_space<vmem>>, vector<128x128xbf16>
    %cst_79 = arith.constant dense<0.000000e+00> : vector<8x128xf32>
    %107 = tpu.matmul %105, %106, %cst_79 {dimension_numbers = #tpu.dot_dimension_numbers<[1], [0], [0], [1], [0, 0, 1, 1], [], []>} : vector<8x128xbf16>, vector<128x128xbf16>, vector<8x128xf32> -> vector<8x128xf32>
    %cst_80 = arith.constant 0.904837429 : f32
    %108 = vector.broadcast %cst_80 : f32 to vector<8x128xf32>
    %109 = arith.mulf %108, %92 : vector<8x128xf32>
    %110 = arith.addf %109, %104 : vector<8x128xf32>
    %111 = arith.addf %110, %107 : vector<8x128xf32>
    %112 = math.tanh %111 : vector<8x128xf32>
    %c0_81 = arith.constant 0 : index
    %c0_82 = arith.constant 0 : index
    %113 = vector.load %arg5[%c0_81, %c0_82] : memref<128x128xf32, #tpu.memory_space<vmem>>, vector<128x128xf32>
    %cst_83 = arith.constant dense<0.000000e+00> : vector<8x128xf32>
    %114 = tpu.matmul %112, %113, %cst_83 {dimension_numbers = #tpu.dot_dimension_numbers<[1], [0], [0], [1], [0, 0, 1, 1], [], []>} : vector<8x128xf32>, vector<128x128xf32>, vector<8x128xf32> -> vector<8x128xf32>
    %115 = arith.index_cast %c5_i32 : i32 to index
    %c0_84 = arith.constant 0 : index
    %c0_85 = arith.constant 0 : index
    %116 = vector.load %arg6[%115, %c0_84, %c0_85] : memref<8x8x128xf32, #tpu.memory_space<vmem>>, vector<1x8x128xf32>
    %117 = vector.shape_cast %116 : vector<1x8x128xf32> to vector<8x128xf32>
    %118 = vector.shape_cast %114 : vector<8x128xf32> to vector<1x8x128xf32>
    tpu.vector_store %arg6[%115, %c0_84, %c0_85], %118 {strides = array<i32>} : memref<8x8x128xf32, #tpu.memory_space<vmem>>, vector<1x8x128xf32>,
    %c6_i32 = arith.constant 6 : i32
    %119 = arith.index_cast %c6_i32 : i32 to index
    %c0_86 = arith.constant 0 : index
    %c0_87 = arith.constant 0 : index
    %120 = vector.load %arg2[%119, %c0_86, %c0_87] : memref<8x8x8xf32, #tpu.memory_space<vmem>>, vector<1x8x8xf32>
    %121 = vector.shape_cast %120 : vector<1x8x8xf32> to vector<8x8xf32>
    %c0_88 = arith.constant 0 : index
    %c0_89 = arith.constant 0 : index
    %122 = vector.load %arg3[%c0_88, %c0_89] : memref<8x128xf32, #tpu.memory_space<vmem>>, vector<8x128xf32>
    %cst_90 = arith.constant dense<0.000000e+00> : vector<8x128xf32>
    %123 = tpu.matmul %121, %122, %cst_90 {dimension_numbers = #tpu.dot_dimension_numbers<[1], [0], [0], [1], [0, 0, 1, 1], [], []>} : vector<8x8xf32>, vector<8x128xf32>, vector<8x128xf32> -> vector<8x128xf32>
    %124 = arith.truncf %112 : vector<8x128xf32> to vector<8x128xbf16>
    %c0_91 = arith.constant 0 : index
    %c0_92 = arith.constant 0 : index
    %125 = vector.load %arg4[%c0_91, %c0_92] : memref<128x128xbf16, #tpu.memory_space<vmem>>, vector<128x128xbf16>
    %cst_93 = arith.constant dense<0.000000e+00> : vector<8x128xf32>
    %126 = tpu.matmul %124, %125, %cst_93 {dimension_numbers = #tpu.dot_dimension_numbers<[1], [0], [0], [1], [0, 0, 1, 1], [], []>} : vector<8x128xbf16>, vector<128x128xbf16>, vector<8x128xf32> -> vector<8x128xf32>
    %cst_94 = arith.constant 0.904837429 : f32
    %127 = vector.broadcast %cst_94 : f32 to vector<8x128xf32>
    %128 = arith.mulf %127, %111 : vector<8x128xf32>
    %129 = arith.addf %128, %123 : vector<8x128xf32>
    %130 = arith.addf %129, %126 : vector<8x128xf32>
    %131 = math.tanh %130 : vector<8x128xf32>
    %c0_95 = arith.constant 0 : index
    %c0_96 = arith.constant 0 : index
    %132 = vector.load %arg5[%c0_95, %c0_96] : memref<128x128xf32, #tpu.memory_space<vmem>>, vector<128x128xf32>
    %cst_97 = arith.constant dense<0.000000e+00> : vector<8x128xf32>
    %133 = tpu.matmul %131, %132, %cst_97 {dimension_numbers = #tpu.dot_dimension_numbers<[1], [0], [0], [1], [0, 0, 1, 1], [], []>} : vector<8x128xf32>, vector<128x128xf32>, vector<8x128xf32> -> vector<8x128xf32>
    %134 = arith.index_cast %c6_i32 : i32 to index
    %c0_98 = arith.constant 0 : index
    %c0_99 = arith.constant 0 : index
    %135 = vector.load %arg6[%134, %c0_98, %c0_99] : memref<8x8x128xf32, #tpu.memory_space<vmem>>, vector<1x8x128xf32>
    %136 = vector.shape_cast %135 : vector<1x8x128xf32> to vector<8x128xf32>
    %137 = vector.shape_cast %133 : vector<8x128xf32> to vector<1x8x128xf32>
    tpu.vector_store %arg6[%134, %c0_98, %c0_99], %137 {strides = array<i32>} : memref<8x8x128xf32, #tpu.memory_space<vmem>>, vector<1x8x128xf32>,
    %c7_i32 = arith.constant 7 : i32
    %138 = arith.index_cast %c7_i32 : i32 to index
    %c0_100 = arith.constant 0 : index
    %c0_101 = arith.constant 0 : index
    %139 = vector.load %arg2[%138, %c0_100, %c0_101] : memref<8x8x8xf32, #tpu.memory_space<vmem>>, vector<1x8x8xf32>
    %140 = vector.shape_cast %139 : vector<1x8x8xf32> to vector<8x8xf32>
    %c0_102 = arith.constant 0 : index
    %c0_103 = arith.constant 0 : index
    %141 = vector.load %arg3[%c0_102, %c0_103] : memref<8x128xf32, #tpu.memory_space<vmem>>, vector<8x128xf32>
    %cst_104 = arith.constant dense<0.000000e+00> : vector<8x128xf32>
    %142 = tpu.matmul %140, %141, %cst_104 {dimension_numbers = #tpu.dot_dimension_numbers<[1], [0], [0], [1], [0, 0, 1, 1], [], []>} : vector<8x8xf32>, vector<8x128xf32>, vector<8x128xf32> -> vector<8x128xf32>
    %143 = arith.truncf %131 : vector<8x128xf32> to vector<8x128xbf16>
    %c0_105 = arith.constant 0 : index
    %c0_106 = arith.constant 0 : index
    %144 = vector.load %arg4[%c0_105, %c0_106] : memref<128x128xbf16, #tpu.memory_space<vmem>>, vector<128x128xbf16>
    %cst_107 = arith.constant dense<0.000000e+00> : vector<8x128xf32>
    %145 = tpu.matmul %143, %144, %cst_107 {dimension_numbers = #tpu.dot_dimension_numbers<[1], [0], [0], [1], [0, 0, 1, 1], [], []>} : vector<8x128xbf16>, vector<128x128xbf16>, vector<8x128xf32> -> vector<8x128xf32>
    %cst_108 = arith.constant 0.904837429 : f32
    %146 = vector.broadcast %cst_108 : f32 to vector<8x128xf32>
    %147 = arith.mulf %146, %130 : vector<8x128xf32>
    %148 = arith.addf %147, %142 : vector<8x128xf32>
    %149 = arith.addf %148, %145 : vector<8x128xf32>
    %150 = math.tanh %149 : vector<8x128xf32>
    %c0_109 = arith.constant 0 : index
    %c0_110 = arith.constant 0 : index
    %151 = vector.load %arg5[%c0_109, %c0_110] : memref<128x128xf32, #tpu.memory_space<vmem>>, vector<128x128xf32>
    %cst_111 = arith.constant dense<0.000000e+00> : vector<8x128xf32>
    %152 = tpu.matmul %150, %151, %cst_111 {dimension_numbers = #tpu.dot_dimension_numbers<[1], [0], [0], [1], [0, 0, 1, 1], [], []>} : vector<8x128xf32>, vector<128x128xf32>, vector<8x128xf32> -> vector<8x128xf32>
    %153 = arith.index_cast %c7_i32 : i32 to index
    %c0_112 = arith.constant 0 : index
    %c0_113 = arith.constant 0 : index
    %154 = vector.load %arg6[%153, %c0_112, %c0_113] : memref<8x8x128xf32, #tpu.memory_space<vmem>>, vector<1x8x128xf32>
    %155 = vector.shape_cast %154 : vector<1x8x128xf32> to vector<8x128xf32>
    %156 = vector.shape_cast %152 : vector<8x128xf32> to vector<1x8x128xf32>
    tpu.vector_store %arg6[%153, %c0_112, %c0_113], %156 {strides = array<i32>} : memref<8x8x128xf32, #tpu.memory_space<vmem>>, vector<1x8x128xf32>,
    %c8_i32 = arith.constant 8 : i32
    %c0_114 = arith.constant 0 : index
    %c0_115 = arith.constant 0 : index
    %157 = vector.load %arg7[%c0_114, %c0_115] : memref<8x128xf32, #tpu.memory_space<vmem>>, vector<8x128xf32>
    tpu.vector_store %arg7[%c0_114, %c0_115], %149 {strides = array<i32>} : memref<8x128xf32, #tpu.memory_space<vmem>>, vector<8x128xf32>,
    return
  }
  func.func @transform_0(%arg0: i32, %arg1: i32) -> (i32, i32, i32) {
    %c0_i32 = arith.constant 0 : i32
    %c0_i32_0 = arith.constant 0 : i32
    return %arg1, %arg0, %c0_i32 : i32, i32, i32
  }
  func.func @transform_1(%arg0: i32, %arg1: i32) -> (i32, i32) {
    %c0_i32 = arith.constant 0 : i32
    %c0_i32_0 = arith.constant 0 : i32
    %c0_i32_1 = arith.constant 0 : i32
    return %c0_i32, %c0_i32_0 : i32, i32
  }
  func.func @transform_2(%arg0: i32, %arg1: i32) -> (i32, i32) {
    %c0_i32 = arith.constant 0 : i32
    %c0_i32_0 = arith.constant 0 : i32
    %c0_i32_1 = arith.constant 0 : i32
    return %c0_i32, %c0_i32_0 : i32, i32
  }
  func.func @transform_3(%arg0: i32, %arg1: i32) -> (i32, i32) {
    %c0_i32 = arith.constant 0 : i32
    %c0_i32_0 = arith.constant 0 : i32
    %c0_i32_1 = arith.constant 0 : i32
    return %c0_i32, %c0_i32_0 : i32, i32
  }
  func.func @transform_4(%arg0: i32, %arg1: i32) -> (i32, i32, i32) {
    %c0_i32 = arith.constant 0 : i32
    %c0_i32_0 = arith.constant 0 : i32
    return %arg1, %arg0, %c0_i32 : i32, i32, i32
  }
}

</mosaic_0001>

<llo_original>
// kernel: tpu_custom_call.1
$region0: #{tpu_custom_call.1}
  #allocation0 [shape = 'u32[]', space=smem, size = 0x4, offset = 0x4, fixed_abs, tag = 'smem constant byte address 0x4 - core index']
  #allocation1 [shape = 'u32[72,128]{1,0:T(1,128)}', space=vmem, size = 0x9000, scoped, tag = 'internal scratch']
  #allocation2 [shape = 'f32[8,128]{1,0:T(8,128)}', space=vmem, size = 0x1000, scoped, tag = 'scratch operand']
  %s0 = inlined_call_operand.hbm [shape: f32[8,8,8], index: 0, kind: input, shape index: {}]
  %s1 = inlined_call_operand.hbm [shape: f32[8,128], index: 1, kind: input, shape index: {}]
  %s2 = inlined_call_operand.hbm [shape: bf16[128,128], index: 2, kind: input, shape index: {}]
  %s3 = inlined_call_operand.hbm [shape: f32[128,128], index: 3, kind: input, shape index: {}]
  %s4 = inlined_call_operand.hbm [shape: f32[8,8,128], index: 4, kind: output, shape index: {}]
  %s5 = sld [smem:[#allocation0]]
  $region46: #{tpu_custom_call.1} parent=0
    _
  %s7 = ssub.s32 1, %s5
  %s8 = scalar_select 0, %s7, %s5
  $region1: #{tpu_custom_call.1} parent=0
    #allocation3 [shape = 'u8[32768]{0}', space=vmem, size = 0x8000, scoped, tag = 'input window, operand 0, single buffered']
    #allocation4 [shape = 's32[1]{0}', space=sflag, size = 0x4, scoped, tag = 'scoped memory for tpu_custom_call.1']
    #allocation5 [shape = 's32[1]{0}', space=sflag, size = 0x4, scoped, tag = 'scoped memory for tpu_custom_call.1']
    #allocation6 [shape = 'u8[4096]{0}', space=vmem, size = 0x1000, scoped, tag = 'input window, operand 1, single buffered']
    #allocation7 [shape = 's32[1]{0}', space=sflag, size = 0x4, scoped, tag = 'scoped memory for tpu_custom_call.1']
    #allocation8 [shape = 'u8[32768]{0}', space=vmem, size = 0x8000, scoped, tag = 'input window, operand 2, single buffered']
    #allocation9 [shape = 'u8[65536]{0}', space=vmem, size = 0x10000, scoped, tag = 'input window, operand 3, single buffered']
    #allocation10 [shape = 's32[1]{0}', space=sflag, size = 0x4, scoped, tag = 'scoped memory for tpu_custom_call.1']
    #allocation11 [shape = 'u8[32768]{0}', space=vmem, size = 0x8000, scoped, tag = 'output window, operand 0, single buffered']
    %9 = vsyncpa [#allocation4], 0
    %10 = vsyncpa [#allocation7], 0
    %11 = vsyncpa [#allocation10], 0
    %12 = vsyncpa [#allocation5], 0
    // Predicated region
    $region2: #{tpu_custom_call.1} parent=1 // pred_check
      _
    $region3: #{tpu_custom_call.1} parent=1 // pred_check_branch
      %14 = sbr.rel (0) target = $region5
    $region4: #{tpu_custom_call.1} parent=1 // pred_region
      %16 = vsyncadd [#allocation4], 0
      %s17 = sshll.u32 %s0, 4
      %s18 = int_to_ptr.hbm [resolvable:$true] %s17
      %s19 = sshll.u32 [#allocation3], 4
      %s20 = int_to_ptr.vmem [resolvable:$true] %s19
      %25 = dma.hbm_to_vmem [thread:$0]  %s18, 1024, %s20, [#allocation4], 128, 128, 8
    $region5: #{tpu_custom_call.1} parent=1 // pred_fallthru
      _
    // Predicated region
    $region6: #{tpu_custom_call.1} parent=1 // pred_check
      _
    $region7: #{tpu_custom_call.1} parent=1 // pred_check_branch
      %27 = sbr.rel (0) target = $region9
    $region8: #{tpu_custom_call.1} parent=1 // pred_region
      %29 = vsyncadd [#allocation7], 0
      %s31 = sshll.u32 %s1, 4
      %s32 = int_to_ptr.hbm [resolvable:$true] %s31
      %s33 = sshll.u32 [#allocation6], 4
      %s34 = int_to_ptr.vmem [resolvable:$true] %s33
      %36 = dma.hbm_to_vmem [thread:$0]  %s32, 128, %s34, [#allocation7]
    $region9: #{tpu_custom_call.1} parent=1 // pred_fallthru
      _
    // Predicated region
    $region10: #{tpu_custom_call.1} parent=1 // pred_check
      _
    $region11: #{tpu_custom_call.1} parent=1 // pred_check_branch
      %38 = sbr.rel (0) target = $region13
    $region12: #{tpu_custom_call.1} parent=1 // pred_region
      %40 = vsyncadd [#allocation7], 0
      %s41 = sshll.u32 %s2, 4
      %s42 = int_to_ptr.hbm [resolvable:$true] %s41
      %s43 = sshll.u32 [#allocation8], 4
      %s44 = int_to_ptr.vmem [resolvable:$true] %s43
      %49 = dma.hbm_to_vmem [thread:$0]  %s42, 1024, %s44, [#allocation7], 64, 64, 4
    $region13: #{tpu_custom_call.1} parent=1 // pred_fallthru
      _
    // Predicated region
    $region14: #{tpu_custom_call.1} parent=1 // pred_check
      _
    $region15: #{tpu_custom_call.1} parent=1 // pred_check_branch
      %51 = sbr.rel (0) target = $region17
    $region16: #{tpu_custom_call.1} parent=1 // pred_region
      %53 = vsyncadd [#allocation10], 0
      %s54 = sshll.u32 %s3, 4
      %s55 = int_to_ptr.hbm [resolvable:$true] %s54
      %s56 = sshll.u32 [#allocation9], 4
      %s57 = int_to_ptr.vmem [resolvable:$true] %s56
      %62 = dma.hbm_to_vmem [thread:$0]  %s55, 2048, %s57, [#allocation10], 128, 128, 8
    $region17: #{tpu_custom_call.1} parent=1 // pred_fallthru
      _
    // Predicated region
    $region18: #{tpu_custom_call.1} parent=1 // pred_check
      _
    $region19: #{tpu_custom_call.1} parent=1 // pred_check_branch
      %64 = sbr.rel (0) target = $region21
    $region20: #{tpu_custom_call.1} parent=1 // pred_region
      %66 = dma.done [#allocation4], 1024
    $region21: #{tpu_custom_call.1} parent=1 // pred_fallthru
      _
    // Predicated region
    $region22: #{tpu_custom_call.1} parent=1 // pred_check
      _
    $region23: #{tpu_custom_call.1} parent=1 // pred_check_branch
      %68 = sbr.rel (0) target = $region25
    $region24: #{tpu_custom_call.1} parent=1 // pred_region
      %70 = dma.done [#allocation7], 128
    $region25: #{tpu_custom_call.1} parent=1 // pred_fallthru
      _
    // Predicated region
    $region26: #{tpu_custom_call.1} parent=1 // pred_check
      _
    $region27: #{tpu_custom_call.1} parent=1 // pred_check_branch
      %72 = sbr.rel (0) target = $region29
    $region28: #{tpu_custom_call.1} parent=1 // pred_region
      %74 = dma.done [#allocation7], 1024
    $region29: #{tpu_custom_call.1} parent=1 // pred_fallthru
      _
    // Predicated region
    $region30: #{tpu_custom_call.1} parent=1 // pred_check
      _
    $region31: #{tpu_custom_call.1} parent=1 // pred_check_branch
      %76 = sbr.rel (0) target = $region33
    $region32: #{tpu_custom_call.1} parent=1 // pred_region
      %78 = dma.done [#allocation10], 2048
    $region33: #{tpu_custom_call.1} parent=1 // pred_fallthru
      _
    %p79 = scmp.eq.s32.totalorder 0, 0
    // Predicated region
    $region34: #{tpu_custom_call.1} parent=1 // pred_check
      %p80 = pneg %p79
    $region35: #{tpu_custom_call.1} parent=1 // pred_check_branch
      %82 = sbr.rel (%p80) target = $region37
    $region36: #{tpu_custom_call.1} parent=1 // pred_region
      %83 = vst [vmem:[#allocation2] sm:$0xff] 0.0
    $region37: #{tpu_custom_call.1} parent=1 // pred_fallthru
      _
    %v84 = vld [vmem:[#allocation2] sm:$0xff]
    %v85 = vtanh.pop %v84
    %v86 = vld [vmem:[#allocation3] sm:$0xff]
    %v87 = vld [vmem:[#allocation6] sm:$0xff]
    %vm88 = vcmask 64512
    %v90 = vsel %vm88, %v86, 0
    %92 = vmatpush.msra.mxu0 0.0
    %93 = vmatpush.msra.mxu0 0.0
    %94 = vmatpush.msra.mxu0 0.0
    %95 = vmatpush.msra.mxu0 0.0
    %96 = vmatpush.msra.mxu0 0.0
    %97 = vmatpush.msra.mxu0 0.0
    %98 = vmatpush.msra.mxu0 0.0
    %99 = vmatpush.msra.mxu0 0.0
    %100 = vmatpush.msra.mxu0 0.0
    %101 = vmatpush.msra.mxu0 0.0
    %102 = vmatpush.msra.mxu0 0.0
    %103 = vmatpush.msra.mxu0 0.0
    %104 = vmatpush.msra.mxu0 0.0
    %105 = vmatpush.msra.mxu0 0.0
    %106 = vmatpush.msra.mxu0 0.0
    %107 = vmatpush.msra.mxu0 %v87
    %108 = vmatmul.f32.gmra.mxu0 %v90
    %v109 = vpop.f32.mrf.mxu0
    %v110 = vadd.f32 0.0, %v109
    %111 = vdwg.mxu0
    %v112 = vpack.c.bf16 %v85, %v85
    %v113 = vld [vmem:[#allocation8] sm:$0xf]
    %v114 = vld [vmem:[#allocation8 + $0x4] sm:$0xf]
    %v115 = vld [vmem:[#allocation8 + $0x8] sm:$0xf]
    %v116 = vld [vmem:[#allocation8 + $0xc] sm:$0xf]
    %v117 = vld [vmem:[#allocation8 + $0x10] sm:$0xf]
    %v118 = vld [vmem:[#allocation8 + $0x14] sm:$0xf]
    %v119 = vld [vmem:[#allocation8 + $0x18] sm:$0xf]
    %v120 = vld [vmem:[#allocation8 + $0x1c] sm:$0xf]
    %v121 = vld [vmem:[#allocation8 + $0x20] sm:$0xf]
    %v122 = vld [vmem:[#allocation8 + $0x24] sm:$0xf]
    %v123 = vld [vmem:[#allocation8 + $0x28] sm:$0xf]
    %v124 = vld [vmem:[#allocation8 + $0x2c] sm:$0xf]
    %v125 = vld [vmem:[#allocation8 + $0x30] sm:$0xf]
    %v126 = vld [vmem:[#allocation8 + $0x34] sm:$0xf]
    %v127 = vld [vmem:[#allocation8 + $0x38] sm:$0xf]
    %v128 = vld [vmem:[#allocation8 + $0x3c] sm:$0xf]
    %v145 = vunpack.c.l.b16 %v113
    %v146 = vunpack.c.l.b16 %v114
    %v147 = vunpack.c.l.b16 %v115
    %v148 = vunpack.c.l.b16 %v116
    %v149 = vunpack.c.l.b16 %v117
    %v150 = vunpack.c.l.b16 %v118
    %v151 = vunpack.c.l.b16 %v119
    %v152 = vunpack.c.l.b16 %v120
    %v153 = vunpack.c.l.b16 %v121
    %v154 = vunpack.c.l.b16 %v122
    %v155 = vunpack.c.l.b16 %v123
    %v156 = vunpack.c.l.b16 %v124
    %v157 = vunpack.c.l.b16 %v125
    %v158 = vunpack.c.l.b16 %v126
    %v159 = vunpack.c.l.b16 %v127
    %v160 = vunpack.c.l.b16 %v128
    %v161 = vpack.c.b16 %v146, %v145
    %v162 = vpack.c.b16 %v148, %v147
    %v163 = vpack.c.b16 %v150, %v149
    %v164 = vpack.c.b16 %v152, %v151
    %v165 = vpack.c.b16 %v154, %v153
    %v166 = vpack.c.b16 %v156, %v155
    %v167 = vpack.c.b16 %v158, %v157
    %v168 = vpack.c.b16 %v160, %v159
    %177 = vmatpush.bf16.msra.mxu0 %v168
    %178 = vmatpush.bf16.msra.mxu0 %v167
    %179 = vmatpush.bf16.msra.mxu0 %v166
    %180 = vmatpush.bf16.msra.mxu0 %v165
    %181 = vmatpush.bf16.msra.mxu0 %v164
    %182 = vmatpush.bf16.msra.mxu0 %v163
    %183 = vmatpush.bf16.msra.mxu0 %v162
    %184 = vmatpush.bf16.msra.mxu0 %v161
    %185 = vmatmul.bf16.gmra.mxu0 %v112
    %v186 = vpop.f32.mrf.mxu0
    %v187 = vadd.f32 0.0, %v186
    %v188 = vpop.f32.mrf.mxu0
    %189 = vdwg.mxu0
    %v190 = vmul.f32 %v84, 0.9048374
    %v191 = vadd.f32 %v190, %v110
    %v192 = vadd.f32 %v191, %v187
    %v193 = vtanh.pop %v192
    %v194 = vld [vmem:[#allocation9] sm:$0xff]
    %v195 = vld [vmem:[#allocation9 + $0x8] sm:$0xff]
    %v196 = vld [vmem:[#allocation9 + $0x10] sm:$0xff]
    %v197 = vld [vmem:[#allocation9 + $0x18] sm:$0xff]
    %v198 = vld [vmem:[#allocation9 + $0x20] sm:$0xff]
    %v199 = vld [vmem:[#allocation9 + $0x28] sm:$0xff]
    %v200 = vld [vmem:[#allocation9 + $0x30] sm:$0xff]
    %v201 = vld [vmem:[#allocation9 + $0x38] sm:$0xff]
    %v202 = vld [vmem:[#allocation9 + $0x40] sm:$0xff]
    %v203 = vld [vmem:[#allocation9 + $0x48] sm:$0xff]
    %v204 = vld [vmem:[#allocation9 + $0x50] sm:$0xff]
    %v205 = vld [vmem:[#allocation9 + $0x58] sm:$0xff]
    %v206 = vld [vmem:[#allocation9 + $0x60] sm:$0xff]
    %v207 = vld [vmem:[#allocation9 + $0x68] sm:$0xff]
    %v208 = vld [vmem:[#allocation9 + $0x70] sm:$0xff]
    %v209 = vld [vmem:[#allocation9 + $0x78] sm:$0xff]
    %210 = vmatpush.msra.mxu0 %v209
    %211 = vmatpush.msra.mxu0 %v208
    %212 = vmatpush.msra.mxu0 %v207
    %213 = vmatpush.msra.mxu0 %v206
    %214 = vmatpush.msra.mxu0 %v205
    %215 = vmatpush.msra.mxu0 %v204
    %216 = vmatpush.msra.mxu0 %v203
    %217 = vmatpush.msra.mxu0 %v202
    %218 = vmatpush.msra.mxu0 %v201
    %219 = vmatpush.msra.mxu0 %v200
    %220 = vmatpush.msra.mxu0 %v199
    %221 = vmatpush.msra.mxu0 %v198
    %222 = vmatpush.msra.mxu0 %v197
    %223 = vmatpush.msra.mxu0 %v196
    %224 = vmatpush.msra.mxu0 %v195
    %225 = vmatpush.msra.mxu0 %v194
    %226 = vmatmul.f32.gmra.mxu0 %v193
    %v227 = vpop.f32.mrf.mxu0
    %v228 = vadd.f32 0.0, %v227
    %229 = vdwg.mxu0
    %230 = vst [vmem:[#allocation11] sm:$0xff] %v228
    %s231 = scalar_lea.vmem [#allocation3], 8
    %v232 = vld [vmem:[%s231] sm:$0xff]
    %v233 = vld [vmem:[#allocation6] sm:$0xff]
    %v235 = vsel %vm88, %v232, 0
    %237 = vmatpush.msra.mxu0 0.0
    %238 = vmatpush.msra.mxu0 0.0
    %239 = vmatpush.msra.mxu0 0.0
    %240 = vmatpush.msra.mxu0 0.0
    %241 = vmatpush.msra.mxu0 0.0
    %242 = vmatpush.msra.mxu0 0.0
    %243 = vmatpush.msra.mxu0 0.0
    %244 = vmatpush.msra.mxu0 0.0
    %245 = vmatpush.msra.mxu0 0.0
    %246 = vmatpush.msra.mxu0 0.0
    %247 = vmatpush.msra.mxu0 0.0
    %248 = vmatpush.msra.mxu0 0.0
    %249 = vmatpush.msra.mxu0 0.0
    %250 = vmatpush.msra.mxu0 0.0
    %251 = vmatpush.msra.mxu0 0.0
    %252 = vmatpush.msra.mxu0 %v233
    %253 = vmatmul.f32.gmra.mxu0 %v235
    %v254 = vpop.f32.mrf.mxu0
    %v255 = vadd.f32 0.0, %v254
    %256 = vdwg.mxu0
    %v257 = vpack.c.bf16 %v193, %v193
    %v258 = vld [vmem:[#allocation8] sm:$0xf]
    %v259 = vld [vmem:[#allocation8 + $0x4] sm:$0xf]
    %v260 = vld [vmem:[#allocation8 + $0x8] sm:$0xf]
    %v261 = vld [vmem:[#allocation8 + $0xc] sm:$0xf]
    %v262 = vld [vmem:[#allocation8 + $0x10] sm:$0xf]
    %v263 = vld [vmem:[#allocation8 + $0x14] sm:$0xf]
    %v264 = vld [vmem:[#allocation8 + $0x18] sm:$0xf]
    %v265 = vld [vmem:[#allocation8 + $0x1c] sm:$0xf]
    %v266 = vld [vmem:[#allocation8 + $0x20] sm:$0xf]
    %v267 = vld [vmem:[#allocation8 + $0x24] sm:$0xf]
    %v268 = vld [vmem:[#allocation8 + $0x28] sm:$0xf]
    %v269 = vld [vmem:[#allocation8 + $0x2c] sm:$0xf]
    %v270 = vld [vmem:[#allocation8 + $0x30] sm:$0xf]
    %v271 = vld [vmem:[#allocation8 + $0x34] sm:$0xf]
    %v272 = vld [vmem:[#allocation8 + $0x38] sm:$0xf]
    %v273 = vld [vmem:[#allocation8 + $0x3c] sm:$0xf]
    %v290 = vunpack.c.l.b16 %v258
    %v291 = vunpack.c.l.b16 %v259
    %v292 = vunpack.c.l.b16 %v260
    %v293 = vunpack.c.l.b16 %v261
    %v294 = vunpack.c.l.b16 %v262
    %v295 = vunpack.c.l.b16 %v263
    %v296 = vunpack.c.l.b16 %v264
    %v297 = vunpack.c.l.b16 %v265
    %v298 = vunpack.c.l.b16 %v266
    %v299 = vunpack.c.l.b16 %v267
    %v300 = vunpack.c.l.b16 %v268
    %v301 = vunpack.c.l.b16 %v269
    %v302 = vunpack.c.l.b16 %v270
    %v303 = vunpack.c.l.b16 %v271
    %v304 = vunpack.c.l.b16 %v272
    %v305 = vunpack.c.l.b16 %v273
    %v306 = vpack.c.b16 %v291, %v290
    %v307 = vpack.c.b16 %v293, %v292
    %v308 = vpack.c.b16 %v295, %v294
    %v309 = vpack.c.b16 %v297, %v296
    %v310 = vpack.c.b16 %v299, %v298
    %v311 = vpack.c.b16 %v301, %v300
    %v312 = vpack.c.b16 %v303, %v302
    %v313 = vpack.c.b16 %v305, %v304
    %322 = vmatpush.bf16.msra.mxu0 %v313
    %323 = vmatpush.bf16.msra.mxu0 %v312
    %324 = vmatpush.bf16.msra.mxu0 %v311
    %325 = vmatpush.bf16.msra.mxu0 %v310
    %326 = vmatpush.bf16.msra.mxu0 %v309
    %327 = vmatpush.bf16.msra.mxu0 %v308
    %328 = vmatpush.bf16.msra.mxu0 %v307
    %329 = vmatpush.bf16.msra.mxu0 %v306
    %330 = vmatmul.bf16.gmra.mxu0 %v257
    %v331 = vpop.f32.mrf.mxu0
    %v332 = vadd.f32 0.0, %v331
    %v333 = vpop.f32.mrf.mxu0
    %334 = vdwg.mxu0
    %v335 = vmul.f32 %v192, 0.9048374
    %v336 = vadd.f32 %v335, %v255
    %v337 = vadd.f32 %v336, %v332
    %v338 = vtanh.pop %v337
    %v339 = vld [vmem:[#allocation9] sm:$0xff]
    %v340 = vld [vmem:[#allocation9 + $0x8] sm:$0xff]
    %v341 = vld [vmem:[#allocation9 + $0x10] sm:$0xff]
    %v342 = vld [vmem:[#allocation9 + $0x18] sm:$0xff]
    %v343 = vld [vmem:[#allocation9 + $0x20] sm:$0xff]
    %v344 = vld [vmem:[#allocation9 + $0x28] sm:$0xff]
    %v345 = vld [vmem:[#allocation9 + $0x30] sm:$0xff]
    %v346 = vld [vmem:[#allocation9 + $0x38] sm:$0xff]
    %v347 = vld [vmem:[#allocation9 + $0x40] sm:$0xff]
    %v348 = vld [vmem:[#allocation9 + $0x48] sm:$0xff]
    %v349 = vld [vmem:[#allocation9 + $0x50] sm:$0xff]
    %v350 = vld [vmem:[#allocation9 + $0x58] sm:$0xff]
    %v351 = vld [vmem:[#allocation9 + $0x60] sm:$0xff]
    %v352 = vld [vmem:[#allocation9 + $0x68] sm:$0xff]
    %v353 = vld [vmem:[#allocation9 + $0x70] sm:$0xff]
    %v354 = vld [vmem:[#allocation9 + $0x78] sm:$0xff]
    %355 = vmatpush.msra.mxu0 %v354
    %356 = vmatpush.msra.mxu0 %v353
    %357 = vmatpush.msra.mxu0 %v352
    %358 = vmatpush.msra.mxu0 %v351
    %359 = vmatpush.msra.mxu0 %v350
    %360 = vmatpush.msra.mxu0 %v349
    %361 = vmatpush.msra.mxu0 %v348
    %362 = vmatpush.msra.mxu0 %v347
    %363 = vmatpush.msra.mxu0 %v346
    %364 = vmatpush.msra.mxu0 %v345
    %365 = vmatpush.msra.mxu0 %v344
    %366 = vmatpush.msra.mxu0 %v343
    %367 = vmatpush.msra.mxu0 %v342
    %368 = vmatpush.msra.mxu0 %v341
    %369 = vmatpush.msra.mxu0 %v340
    %370 = vmatpush.msra.mxu0 %v339
    %371 = vmatmul.f32.gmra.mxu0 %v338
    %v372 = vpop.f32.mrf.mxu0
    %v373 = vadd.f32 0.0, %v372
    %374 = vdwg.mxu0
    %s375 = scalar_lea.vmem [#allocation11], 8
    %376 = vst [vmem:[%s375] sm:$0xff] %v373
    %s377 = scalar_lea.vmem [#allocation3], 16
    %v378 = vld [vmem:[%s377] sm:$0xff]
    %v379 = vld [vmem:[#allocation6] sm:$0xff]
    %v381 = vsel %vm88, %v378, 0
    %383 = vmatpush.msra.mxu0 0.0
    %384 = vmatpush.msra.mxu0 0.0
    %385 = vmatpush.msra.mxu0 0.0
    %386 = vmatpush.msra.mxu0 0.0
    %387 = vmatpush.msra.mxu0 0.0
    %388 = vmatpush.msra.mxu0 0.0
    %389 = vmatpush.msra.mxu0 0.0
    %390 = vmatpush.msra.mxu0 0.0
    %391 = vmatpush.msra.mxu0 0.0
    %392 = vmatpush.msra.mxu0 0.0
    %393 = vmatpush.msra.mxu0 0.0
    %394 = vmatpush.msra.mxu0 0.0
    %395 = vmatpush.msra.mxu0 0.0
    %396 = vmatpush.msra.mxu0 0.0
    %397 = vmatpush.msra.mxu0 0.0
    %398 = vmatpush.msra.mxu0 %v379
    %399 = vmatmul.f32.gmra.mxu0 %v381
    %v400 = vpop.f32.mrf.mxu0
    %v401 = vadd.f32 0.0, %v400
    %402 = vdwg.mxu0
    %v403 = vpack.c.bf16 %v338, %v338
    %v404 = vld [vmem:[#allocation8] sm:$0xf]
    %v405 = vld [vmem:[#allocation8 + $0x4] sm:$0xf]
    %v406 = vld [vmem:[#allocation8 + $0x8] sm:$0xf]
    %v407 = vld [vmem:[#allocation8 + $0xc] sm:$0xf]
    %v408 = vld [vmem:[#allocation8 + $0x10] sm:$0xf]
    %v409 = vld [vmem:[#allocation8 + $0x14] sm:$0xf]
    %v410 = vld [vmem:[#allocation8 + $0x18] sm:$0xf]
    %v411 = vld [vmem:[#allocation8 + $0x1c] sm:$0xf]
    %v412 = vld [vmem:[#allocation8 + $0x20] sm:$0xf]
    %v413 = vld [vmem:[#allocation8 + $0x24] sm:$0xf]
    %v414 = vld [vmem:[#allocation8 + $0x28] sm:$0xf]
    %v415 = vld [vmem:[#allocation8 + $0x2c] sm:$0xf]
    %v416 = vld [vmem:[#allocation8 + $0x30] sm:$0xf]
    %v417 = vld [vmem:[#allocation8 + $0x34] sm:$0xf]
    %v418 = vld [vmem:[#allocation8 + $0x38] sm:$0xf]
    %v419 = vld [vmem:[#allocation8 + $0x3c] sm:$0xf]
    %v436 = vunpack.c.l.b16 %v404
    %v437 = vunpack.c.l.b16 %v405
    %v438 = vunpack.c.l.b16 %v406
    %v439 = vunpack.c.l.b16 %v407
    %v440 = vunpack.c.l.b16 %v408
    %v441 = vunpack.c.l.b16 %v409
    %v442 = vunpack.c.l.b16 %v410
    %v443 = vunpack.c.l.b16 %v411
    %v444 = vunpack.c.l.b16 %v412
    %v445 = vunpack.c.l.b16 %v413
    %v446 = vunpack.c.l.b16 %v414
    %v447 = vunpack.c.l.b16 %v415
    %v448 = vunpack.c.l.b16 %v416
    %v449 = vunpack.c.l.b16 %v417
    %v450 = vunpack.c.l.b16 %v418
    %v451 = vunpack.c.l.b16 %v419
    %v452 = vpack.c.b16 %v437, %v436
    %v453 = vpack.c.b16 %v439, %v438
    %v454 = vpack.c.b16 %v441, %v440
    %v455 = vpack.c.b16 %v443, %v442
    %v456 = vpack.c.b16 %v445, %v444
    %v457 = vpack.c.b16 %v447, %v446
    %v458 = vpack.c.b16 %v449, %v448
    %v459 = vpack.c.b16 %v451, %v450
    %468 = vmatpush.bf16.msra.mxu0 %v459
    %469 = vmatpush.bf16.msra.mxu0 %v458
    %470 = vmatpush.bf16.msra.mxu0 %v457
    %471 = vmatpush.bf16.msra.mxu0 %v456
    %472 = vmatpush.bf16.msra.mxu0 %v455
    %473 = vmatpush.bf16.msra.mxu0 %v454
    %474 = vmatpush.bf16.msra.mxu0 %v453
    %475 = vmatpush.bf16.msra.mxu0 %v452
    %476 = vmatmul.bf16.gmra.mxu0 %v403
    %v477 = vpop.f32.mrf.mxu0
    %v478 = vadd.f32 0.0, %v477
    %v479 = vpop.f32.mrf.mxu0
    %480 = vdwg.mxu0
    %v481 = vmul.f32 %v337, 0.9048374
    %v482 = vadd.f32 %v481, %v401
    %v483 = vadd.f32 %v482, %v478
    %v484 = vtanh.pop %v483
    %v485 = vld [vmem:[#allocation9] sm:$0xff]
    %v486 = vld [vmem:[#allocation9 + $0x8] sm:$0xff]
    %v487 = vld [vmem:[#allocation9 + $0x10] sm:$0xff]
    %v488 = vld [vmem:[#allocation9 + $0x18] sm:$0xff]
    %v489 = vld [vmem:[#allocation9 + $0x20] sm:$0xff]
    %v490 = vld [vmem:[#allocation9 + $0x28] sm:$0xff]
    %v491 = vld [vmem:[#allocation9 + $0x30] sm:$0xff]
    %v492 = vld [vmem:[#allocation9 + $0x38] sm:$0xff]
    %v493 = vld [vmem:[#allocation9 + $0x40] sm:$0xff]
    %v494 = vld [vmem:[#allocation9 + $0x48] sm:$0xff]
    %v495 = vld [vmem:[#allocation9 + $0x50] sm:$0xff]
    %v496 = vld [vmem:[#allocation9 + $0x58] sm:$0xff]
    %v497 = vld [vmem:[#allocation9 + $0x60] sm:$0xff]
    %v498 = vld [vmem:[#allocation9 + $0x68] sm:$0xff]
    %v499 = vld [vmem:[#allocation9 + $0x70] sm:$0xff]
    %v500 = vld [vmem:[#allocation9 + $0x78] sm:$0xff]
    %501 = vmatpush.msra.mxu0 %v500
    %502 = vmatpush.msra.mxu0 %v499
    %503 = vmatpush.msra.mxu0 %v498
    %504 = vmatpush.msra.mxu0 %v497
    %505 = vmatpush.msra.mxu0 %v496
    %506 = vmatpush.msra.mxu0 %v495
    %507 = vmatpush.msra.mxu0 %v494
    %508 = vmatpush.msra.mxu0 %v493
    %509 = vmatpush.msra.mxu0 %v492
    %510 = vmatpush.msra.mxu0 %v491
    %511 = vmatpush.msra.mxu0 %v490
    %512 = vmatpush.msra.mxu0 %v489
    %513 = vmatpush.msra.mxu0 %v488
    %514 = vmatpush.msra.mxu0 %v487
    %515 = vmatpush.msra.mxu0 %v486
    %516 = vmatpush.msra.mxu0 %v485
    %517 = vmatmul.f32.gmra.mxu0 %v484
    %v518 = vpop.f32.mrf.mxu0
    %v519 = vadd.f32 0.0, %v518
    %520 = vdwg.mxu0
    %s521 = scalar_lea.vmem [#allocation11], 16
    %522 = vst [vmem:[%s521] sm:$0xff] %v519
    %s523 = scalar_lea.vmem [#allocation3], 24
    %v524 = vld [vmem:[%s523] sm:$0xff]
    %v525 = vld [vmem:[#allocation6] sm:$0xff]
    %v527 = vsel %vm88, %v524, 0
    %529 = vmatpush.msra.mxu0 0.0
    %530 = vmatpush.msra.mxu0 0.0
    %531 = vmatpush.msra.mxu0 0.0
    %532 = vmatpush.msra.mxu0 0.0
    %533 = vmatpush.msra.mxu0 0.0
    %534 = vmatpush.msra.mxu0 0.0
    %535 = vmatpush.msra.mxu0 0.0
    %536 = vmatpush.msra.mxu0 0.0
    %537 = vmatpush.msra.mxu0 0.0
    %538 = vmatpush.msra.mxu0 0.0
    %539 = vmatpush.msra.mxu0 0.0
    %540 = vmatpush.msra.mxu0 0.0
    %541 = vmatpush.msra.mxu0 0.0
    %542 = vmatpush.msra.mxu0 0.0
    %543 = vmatpush.msra.mxu0 0.0
    %544 = vmatpush.msra.mxu0 %v525
    %545 = vmatmul.f32.gmra.mxu0 %v527
    %v546 = vpop.f32.mrf.mxu0
    %v547 = vadd.f32 0.0, %v546
    %548 = vdwg.mxu0
    %v549 = vpack.c.bf16 %v484, %v484
    %v550 = vld [vmem:[#allocation8] sm:$0xf]
    %v551 = vld [vmem:[#allocation8 + $0x4] sm:$0xf]
    %v552 = vld [vmem:[#allocation8 + $0x8] sm:$0xf]
    %v553 = vld [vmem:[#allocation8 + $0xc] sm:$0xf]
    %v554 = vld [vmem:[#allocation8 + $0x10] sm:$0xf]
    %v555 = vld [vmem:[#allocation8 + $0x14] sm:$0xf]
    %v556 = vld [vmem:[#allocation8 + $0x18] sm:$0xf]
    %v557 = vld [vmem:[#allocation8 + $0x1c] sm:$0xf]
    %v558 = vld [vmem:[#allocation8 + $0x20] sm:$0xf]
    %v559 = vld [vmem:[#allocation8 + $0x24] sm:$0xf]
    %v560 = vld [vmem:[#allocation8 + $0x28] sm:$0xf]
    %v561 = vld [vmem:[#allocation8 + $0x2c] sm:$0xf]
    %v562 = vld [vmem:[#allocation8 + $0x30] sm:$0xf]
    %v563 = vld [vmem:[#allocation8 + $0x34] sm:$0xf]
    %v564 = vld [vmem:[#allocation8 + $0x38] sm:$0xf]
    %v565 = vld [vmem:[#allocation8 + $0x3c] sm:$0xf]
    %v582 = vunpack.c.l.b16 %v550
    %v583 = vunpack.c.l.b16 %v551
    %v584 = vunpack.c.l.b16 %v552
    %v585 = vunpack.c.l.b16 %v553
    %v586 = vunpack.c.l.b16 %v554
    %v587 = vunpack.c.l.b16 %v555
    %v588 = vunpack.c.l.b16 %v556
    %v589 = vunpack.c.l.b16 %v557
    %v590 = vunpack.c.l.b16 %v558
    %v591 = vunpack.c.l.b16 %v559
    %v592 = vunpack.c.l.b16 %v560
    %v593 = vunpack.c.l.b16 %v561
    %v594 = vunpack.c.l.b16 %v562
    %v595 = vunpack.c.l.b16 %v563
    %v596 = vunpack.c.l.b16 %v564
    %v597 = vunpack.c.l.b16 %v565
    %v598 = vpack.c.b16 %v583, %v582
    %v599 = vpack.c.b16 %v585, %v584
    %v600 = vpack.c.b16 %v587, %v586
    %v601 = vpack.c.b16 %v589, %v588
    %v602 = vpack.c.b16 %v591, %v590
    %v603 = vpack.c.b16 %v593, %v592
    %v604 = vpack.c.b16 %v595, %v594
    %v605 = vpack.c.b16 %v597, %v596
    %614 = vmatpush.bf16.msra.mxu0 %v605
    %615 = vmatpush.bf16.msra.mxu0 %v604
    %616 = vmatpush.bf16.msra.mxu0 %v603
    %617 = vmatpush.bf16.msra.mxu0 %v602
    %618 = vmatpush.bf16.msra.mxu0 %v601
    %619 = vmatpush.bf16.msra.mxu0 %v600
    %620 = vmatpush.bf16.msra.mxu0 %v599
    %621 = vmatpush.bf16.msra.mxu0 %v598
    %622 = vmatmul.bf16.gmra.mxu0 %v549
    %v623 = vpop.f32.mrf.mxu0
    %v624 = vadd.f32 0.0, %v623
    %v625 = vpop.f32.mrf.mxu0
    %626 = vdwg.mxu0
    %v627 = vmul.f32 %v483, 0.9048374
    %v628 = vadd.f32 %v627, %v547
    %v629 = vadd.f32 %v628, %v624
    %v630 = vtanh.pop %v629
    %v631 = vld [vmem:[#allocation9] sm:$0xff]
    %v632 = vld [vmem:[#allocation9 + $0x8] sm:$0xff]
    %v633 = vld [vmem:[#allocation9 + $0x10] sm:$0xff]
    %v634 = vld [vmem:[#allocation9 + $0x18] sm:$0xff]
    %v635 = vld [vmem:[#allocation9 + $0x20] sm:$0xff]
    %v636 = vld [vmem:[#allocation9 + $0x28] sm:$0xff]
    %v637 = vld [vmem:[#allocation9 + $0x30] sm:$0xff]
    %v638 = vld [vmem:[#allocation9 + $0x38] sm:$0xff]
    %v639 = vld [vmem:[#allocation9 + $0x40] sm:$0xff]
    %v640 = vld [vmem:[#allocation9 + $0x48] sm:$0xff]
    %v641 = vld [vmem:[#allocation9 + $0x50] sm:$0xff]
    %v642 = vld [vmem:[#allocation9 + $0x58] sm:$0xff]
    %v643 = vld [vmem:[#allocation9 + $0x60] sm:$0xff]
    %v644 = vld [vmem:[#allocation9 + $0x68] sm:$0xff]
    %v645 = vld [vmem:[#allocation9 + $0x70] sm:$0xff]
    %v646 = vld [vmem:[#allocation9 + $0x78] sm:$0xff]
    %647 = vmatpush.msra.mxu0 %v646
    %648 = vmatpush.msra.mxu0 %v645
    %649 = vmatpush.msra.mxu0 %v644
    %650 = vmatpush.msra.mxu0 %v643
    %651 = vmatpush.msra.mxu0 %v642
    %652 = vmatpush.msra.mxu0 %v641
    %653 = vmatpush.msra.mxu0 %v640
    %654 = vmatpush.msra.mxu0 %v639
    %655 = vmatpush.msra.mxu0 %v638
    %656 = vmatpush.msra.mxu0 %v637
    %657 = vmatpush.msra.mxu0 %v636
    %658 = vmatpush.msra.mxu0 %v635
    %659 = vmatpush.msra.mxu0 %v634
    %660 = vmatpush.msra.mxu0 %v633
    %661 = vmatpush.msra.mxu0 %v632
    %662 = vmatpush.msra.mxu0 %v631
    %663 = vmatmul.f32.gmra.mxu0 %v630
    %v664 = vpop.f32.mrf.mxu0
    %v665 = vadd.f32 0.0, %v664
    %666 = vdwg.mxu0
    %s667 = scalar_lea.vmem [#allocation11], 24
    %668 = vst [vmem:[%s667] sm:$0xff] %v665
    %s669 = scalar_lea.vmem [#allocation3], 32
    %v670 = vld [vmem:[%s669] sm:$0xff]
    %v671 = vld [vmem:[#allocation6] sm:$0xff]
    %v673 = vsel %vm88, %v670, 0
    %675 = vmatpush.msra.mxu0 0.0
    %676 = vmatpush.msra.mxu0 0.0
    %677 = vmatpush.msra.mxu0 0.0
    %678 = vmatpush.msra.mxu0 0.0
    %679 = vmatpush.msra.mxu0 0.0
    %680 = vmatpush.msra.mxu0 0.0
    %681 = vmatpush.msra.mxu0 0.0
    %682 = vmatpush.msra.mxu0 0.0
    %683 = vmatpush.msra.mxu0 0.0
    %684 = vmatpush.msra.mxu0 0.0
    %685 = vmatpush.msra.mxu0 0.0
    %686 = vmatpush.msra.mxu0 0.0
    %687 = vmatpush.msra.mxu0 0.0
    %688 = vmatpush.msra.mxu0 0.0
    %689 = vmatpush.msra.mxu0 0.0
    %690 = vmatpush.msra.mxu0 %v671
    %691 = vmatmul.f32.gmra.mxu0 %v673
    %v692 = vpop.f32.mrf.mxu0
    %v693 = vadd.f32 0.0, %v692
    %694 = vdwg.mxu0
    %v695 = vpack.c.bf16 %v630, %v630
    %v696 = vld [vmem:[#allocation8] sm:$0xf]
    %v697 = vld [vmem:[#allocation8 + $0x4] sm:$0xf]
    %v698 = vld [vmem:[#allocation8 + $0x8] sm:$0xf]
    %v699 = vld [vmem:[#allocation8 + $0xc] sm:$0xf]
    %v700 = vld [vmem:[#allocation8 + $0x10] sm:$0xf]
    %v701 = vld [vmem:[#allocation8 + $0x14] sm:$0xf]
    %v702 = vld [vmem:[#allocation8 + $0x18] sm:$0xf]
    %v703 = vld [vmem:[#allocation8 + $0x1c] sm:$0xf]
    %v704 = vld [vmem:[#allocation8 + $0x20] sm:$0xf]
    %v705 = vld [vmem:[#allocation8 + $0x24] sm:$0xf]
    %v706 = vld [vmem:[#allocation8 + $0x28] sm:$0xf]
    %v707 = vld [vmem:[#allocation8 + $0x2c] sm:$0xf]
    %v708 = vld [vmem:[#allocation8 + $0x30] sm:$0xf]
    %v709 = vld [vmem:[#allocation8 + $0x34] sm:$0xf]
    %v710 = vld [vmem:[#allocation8 + $0x38] sm:$0xf]
    %v711 = vld [vmem:[#allocation8 + $0x3c] sm:$0xf]
    %v728 = vunpack.c.l.b16 %v696
    %v729 = vunpack.c.l.b16 %v697
    %v730 = vunpack.c.l.b16 %v698
    %v731 = vunpack.c.l.b16 %v699
    %v732 = vunpack.c.l.b16 %v700
    %v733 = vunpack.c.l.b16 %v701
    %v734 = vunpack.c.l.b16 %v702
    %v735 = vunpack.c.l.b16 %v703
    %v736 = vunpack.c.l.b16 %v704
    %v737 = vunpack.c.l.b16 %v705
    %v738 = vunpack.c.l.b16 %v706
    %v739 = vunpack.c.l.b16 %v707
    %v740 = vunpack.c.l.b16 %v708
    %v741 = vunpack.c.l.b16 %v709
    %v742 = vunpack.c.l.b16 %v710
    %v743 = vunpack.c.l.b16 %v711
    %v744 = vpack.c.b16 %v729, %v728
    %v745 = vpack.c.b16 %v731, %v730
    %v746 = vpack.c.b16 %v733, %v732
    %v747 = vpack.c.b16 %v735, %v734
    %v748 = vpack.c.b16 %v737, %v736
    %v749 = vpack.c.b16 %v739, %v738
    %v750 = vpack.c.b16 %v741, %v740
    %v751 = vpack.c.b16 %v743, %v742
    %760 = vmatpush.bf16.msra.mxu0 %v751
    %761 = vmatpush.bf16.msra.mxu0 %v750
    %762 = vmatpush.bf16.msra.mxu0 %v749
    %763 = vmatpush.bf16.msra.mxu0 %v748
    %764 = vmatpush.bf16.msra.mxu0 %v747
    %765 = vmatpush.bf16.msra.mxu0 %v746
    %766 = vmatpush.bf16.msra.mxu0 %v745
    %767 = vmatpush.bf16.msra.mxu0 %v744
    %768 = vmatmul.bf16.gmra.mxu0 %v695
    %v769 = vpop.f32.mrf.mxu0
    %v770 = vadd.f32 0.0, %v769
    %v771 = vpop.f32.mrf.mxu0
    %772 = vdwg.mxu0
    %v773 = vmul.f32 %v629, 0.9048374
    %v774 = vadd.f32 %v773, %v693
    %v775 = vadd.f32 %v774, %v770
    %v776 = vtanh.pop %v775
    %v777 = vld [vmem:[#allocation9] sm:$0xff]
    %v778 = vld [vmem:[#allocation9 + $0x8] sm:$0xff]
    %v779 = vld [vmem:[#allocation9 + $0x10] sm:$0xff]
    %v780 = vld [vmem:[#allocation9 + $0x18] sm:$0xff]
    %v781 = vld [vmem:[#allocation9 + $0x20] sm:$0xff]
    %v782 = vld [vmem:[#allocation9 + $0x28] sm:$0xff]
    %v783 = vld [vmem:[#allocation9 + $0x30] sm:$0xff]
    %v784 = vld [vmem:[#allocation9 + $0x38] sm:$0xff]
    %v785 = vld [vmem:[#allocation9 + $0x40] sm:$0xff]
    %v786 = vld [vmem:[#allocation9 + $0x48] sm:$0xff]
    %v787 = vld [vmem:[#allocation9 + $0x50] sm:$0xff]
    %v788 = vld [vmem:[#allocation9 + $0x58] sm:$0xff]
    %v789 = vld [vmem:[#allocation9 + $0x60] sm:$0xff]
    %v790 = vld [vmem:[#allocation9 + $0x68] sm:$0xff]
    %v791 = vld [vmem:[#allocation9 + $0x70] sm:$0xff]
    %v792 = vld [vmem:[#allocation9 + $0x78] sm:$0xff]
    %793 = vmatpush.msra.mxu0 %v792
    %794 = vmatpush.msra.mxu0 %v791
    %795 = vmatpush.msra.mxu0 %v790
    %796 = vmatpush.msra.mxu0 %v789
    %797 = vmatpush.msra.mxu0 %v788
    %798 = vmatpush.msra.mxu0 %v787
    %799 = vmatpush.msra.mxu0 %v786
    %800 = vmatpush.msra.mxu0 %v785
    %801 = vmatpush.msra.mxu0 %v784
    %802 = vmatpush.msra.mxu0 %v783
    %803 = vmatpush.msra.mxu0 %v782
    %804 = vmatpush.msra.mxu0 %v781
    %805 = vmatpush.msra.mxu0 %v780
    %806 = vmatpush.msra.mxu0 %v779
    %807 = vmatpush.msra.mxu0 %v778
    %808 = vmatpush.msra.mxu0 %v777
    %809 = vmatmul.f32.gmra.mxu0 %v776
    %v810 = vpop.f32.mrf.mxu0
    %v811 = vadd.f32 0.0, %v810
    %812 = vdwg.mxu0
    %s813 = scalar_lea.vmem [#allocation11], 32
    %814 = vst [vmem:[%s813] sm:$0xff] %v811
    %s815 = scalar_lea.vmem [#allocation3], 40
    %v816 = vld [vmem:[%s815] sm:$0xff]
    %v817 = vld [vmem:[#allocation6] sm:$0xff]
    %v819 = vsel %vm88, %v816, 0
    %821 = vmatpush.msra.mxu0 0.0
    %822 = vmatpush.msra.mxu0 0.0
    %823 = vmatpush.msra.mxu0 0.0
    %824 = vmatpush.msra.mxu0 0.0
    %825 = vmatpush.msra.mxu0 0.0
    %826 = vmatpush.msra.mxu0 0.0
    %827 = vmatpush.msra.mxu0 0.0
    %828 = vmatpush.msra.mxu0 0.0
    %829 = vmatpush.msra.mxu0 0.0
    %830 = vmatpush.msra.mxu0 0.0
    %831 = vmatpush.msra.mxu0 0.0
    %832 = vmatpush.msra.mxu0 0.0
    %833 = vmatpush.msra.mxu0 0.0
    %834 = vmatpush.msra.mxu0 0.0
    %835 = vmatpush.msra.mxu0 0.0
    %836 = vmatpush.msra.mxu0 %v817
    %837 = vmatmul.f32.gmra.mxu0 %v819
    %v838 = vpop.f32.mrf.mxu0
    %v839 = vadd.f32 0.0, %v838
    %840 = vdwg.mxu0
    %v841 = vpack.c.bf16 %v776, %v776
    %v842 = vld [vmem:[#allocation8] sm:$0xf]
    %v843 = vld [vmem:[#allocation8 + $0x4] sm:$0xf]
    %v844 = vld [vmem:[#allocation8 + $0x8] sm:$0xf]
    %v845 = vld [vmem:[#allocation8 + $0xc] sm:$0xf]
    %v846 = vld [vmem:[#allocation8 + $0x10] sm:$0xf]
    %v847 = vld [vmem:[#allocation8 + $0x14] sm:$0xf]
    %v848 = vld [vmem:[#allocation8 + $0x18] sm:$0xf]
    %v849 = vld [vmem:[#allocation8 + $0x1c] sm:$0xf]
    %v850 = vld [vmem:[#allocation8 + $0x20] sm:$0xf]
    %v851 = vld [vmem:[#allocation8 + $0x24] sm:$0xf]
    %v852 = vld [vmem:[#allocation8 + $0x28] sm:$0xf]
    %v853 = vld [vmem:[#allocation8 + $0x2c] sm:$0xf]
    %v854 = vld [vmem:[#allocation8 + $0x30] sm:$0xf]
    %v855 = vld [vmem:[#allocation8 + $0x34] sm:$0xf]
    %v856 = vld [vmem:[#allocation8 + $0x38] sm:$0xf]
    %v857 = vld [vmem:[#allocation8 + $0x3c] sm:$0xf]
    %v874 = vunpack.c.l.b16 %v842
    %v875 = vunpack.c.l.b16 %v843
    %v876 = vunpack.c.l.b16 %v844
    %v877 = vunpack.c.l.b16 %v845
    %v878 = vunpack.c.l.b16 %v846
    %v879 = vunpack.c.l.b16 %v847
    %v880 = vunpack.c.l.b16 %v848
    %v881 = vunpack.c.l.b16 %v849
    %v882 = vunpack.c.l.b16 %v850
    %v883 = vunpack.c.l.b16 %v851
    %v884 = vunpack.c.l.b16 %v852
    %v885 = vunpack.c.l.b16 %v853
    %v886 = vunpack.c.l.b16 %v854
    %v887 = vunpack.c.l.b16 %v855
    %v888 = vunpack.c.l.b16 %v856
    %v889 = vunpack.c.l.b16 %v857
    %v890 = vpack.c.b16 %v875, %v874
    %v891 = vpack.c.b16 %v877, %v876
    %v892 = vpack.c.b16 %v879, %v878
    %v893 = vpack.c.b16 %v881, %v880
    %v894 = vpack.c.b16 %v883, %v882
    %v895 = vpack.c.b16 %v885, %v884
    %v896 = vpack.c.b16 %v887, %v886
    %v897 = vpack.c.b16 %v889, %v888
    %906 = vmatpush.bf16.msra.mxu0 %v897
    %907 = vmatpush.bf16.msra.mxu0 %v896
    %908 = vmatpush.bf16.msra.mxu0 %v895
    %909 = vmatpush.bf16.msra.mxu0 %v894
    %910 = vmatpush.bf16.msra.mxu0 %v893
    %911 = vmatpush.bf16.msra.mxu0 %v892
    %912 = vmatpush.bf16.msra.mxu0 %v891
    %913 = vmatpush.bf16.msra.mxu0 %v890
    %914 = vmatmul.bf16.gmra.mxu0 %v841
    %v915 = vpop.f32.mrf.mxu0
    %v916 = vadd.f32 0.0, %v915
    %v917 = vpop.f32.mrf.mxu0
    %918 = vdwg.mxu0
    %v919 = vmul.f32 %v775, 0.9048374
    %v920 = vadd.f32 %v919, %v839
    %v921 = vadd.f32 %v920, %v916
    %v922 = vtanh.pop %v921
    %v923 = vld [vmem:[#allocation9] sm:$0xff]
    %v924 = vld [vmem:[#allocation9 + $0x8] sm:$0xff]
    %v925 = vld [vmem:[#allocation9 + $0x10] sm:$0xff]
    %v926 = vld [vmem:[#allocation9 + $0x18] sm:$0xff]
    %v927 = vld [vmem:[#allocation9 + $0x20] sm:$0xff]
    %v928 = vld [vmem:[#allocation9 + $0x28] sm:$0xff]
    %v929 = vld [vmem:[#allocation9 + $0x30] sm:$0xff]
    %v930 = vld [vmem:[#allocation9 + $0x38] sm:$0xff]
    %v931 = vld [vmem:[#allocation9 + $0x40] sm:$0xff]
    %v932 = vld [vmem:[#allocation9 + $0x48] sm:$0xff]
    %v933 = vld [vmem:[#allocation9 + $0x50] sm:$0xff]
    %v934 = vld [vmem:[#allocation9 + $0x58] sm:$0xff]
    %v935 = vld [vmem:[#allocation9 + $0x60] sm:$0xff]
    %v936 = vld [vmem:[#allocation9 + $0x68] sm:$0xff]
    %v937 = vld [vmem:[#allocation9 + $0x70] sm:$0xff]
    %v938 = vld [vmem:[#allocation9 + $0x78] sm:$0xff]
    %939 = vmatpush.msra.mxu0 %v938
    %940 = vmatpush.msra.mxu0 %v937
    %941 = vmatpush.msra.mxu0 %v936
    %942 = vmatpush.msra.mxu0 %v935
    %943 = vmatpush.msra.mxu0 %v934
    %944 = vmatpush.msra.mxu0 %v933
    %945 = vmatpush.msra.mxu0 %v932
    %946 = vmatpush.msra.mxu0 %v931
    %947 = vmatpush.msra.mxu0 %v930
    %948 = vmatpush.msra.mxu0 %v929
    %949 = vmatpush.msra.mxu0 %v928
    %950 = vmatpush.msra.mxu0 %v927
    %951 = vmatpush.msra.mxu0 %v926
    %952 = vmatpush.msra.mxu0 %v925
    %953 = vmatpush.msra.mxu0 %v924
    %954 = vmatpush.msra.mxu0 %v923
    %955 = vmatmul.f32.gmra.mxu0 %v922
    %v956 = vpop.f32.mrf.mxu0
    %v957 = vadd.f32 0.0, %v956
    %958 = vdwg.mxu0
    %s959 = scalar_lea.vmem [#allocation11], 40
    %960 = vst [vmem:[%s959] sm:$0xff] %v957
    %s961 = scalar_lea.vmem [#allocation3], 48
    %v962 = vld [vmem:[%s961] sm:$0xff]
    %v963 = vld [vmem:[#allocation6] sm:$0xff]
    %v965 = vsel %vm88, %v962, 0
    %967 = vmatpush.msra.mxu0 0.0
    %968 = vmatpush.msra.mxu0 0.0
    %969 = vmatpush.msra.mxu0 0.0
    %970 = vmatpush.msra.mxu0 0.0
    %971 = vmatpush.msra.mxu0 0.0
    %972 = vmatpush.msra.mxu0 0.0
    %973 = vmatpush.msra.mxu0 0.0
    %974 = vmatpush.msra.mxu0 0.0
    %975 = vmatpush.msra.mxu0 0.0
    %976 = vmatpush.msra.mxu0 0.0
    %977 = vmatpush.msra.mxu0 0.0
    %978 = vmatpush.msra.mxu0 0.0
    %979 = vmatpush.msra.mxu0 0.0
    %980 = vmatpush.msra.mxu0 0.0
    %981 = vmatpush.msra.mxu0 0.0
    %982 = vmatpush.msra.mxu0 %v963
    %983 = vmatmul.f32.gmra.mxu0 %v965
    %v984 = vpop.f32.mrf.mxu0
    %v985 = vadd.f32 0.0, %v984
    %986 = vdwg.mxu0
    %v987 = vpack.c.bf16 %v922, %v922
    %v988 = vld [vmem:[#allocation8] sm:$0xf]
    %v989 = vld [vmem:[#allocation8 + $0x4] sm:$0xf]
    %v990 = vld [vmem:[#allocation8 + $0x8] sm:$0xf]
    %v991 = vld [vmem:[#allocation8 + $0xc] sm:$0xf]
    %v992 = vld [vmem:[#allocation8 + $0x10] sm:$0xf]
    %v993 = vld [vmem:[#allocation8 + $0x14] sm:$0xf]
    %v994 = vld [vmem:[#allocation8 + $0x18] sm:$0xf]
    %v995 = vld [vmem:[#allocation8 + $0x1c] sm:$0xf]
    %v996 = vld [vmem:[#allocation8 + $0x20] sm:$0xf]
    %v997 = vld [vmem:[#allocation8 + $0x24] sm:$0xf]
    %v998 = vld [vmem:[#allocation8 + $0x28] sm:$0xf]
    %v999 = vld [vmem:[#allocation8 + $0x2c] sm:$0xf]
    %v1000 = vld [vmem:[#allocation8 + $0x30] sm:$0xf]
    %v1001 = vld [vmem:[#allocation8 + $0x34] sm:$0xf]
    %v1002 = vld [vmem:[#allocation8 + $0x38] sm:$0xf]
    %v1003 = vld [vmem:[#allocation8 + $0x3c] sm:$0xf]
    %v1020 = vunpack.c.l.b16 %v988
    %v1021 = vunpack.c.l.b16 %v989
    %v1022 = vunpack.c.l.b16 %v990
    %v1023 = vunpack.c.l.b16 %v991
    %v1024 = vunpack.c.l.b16 %v992
    %v1025 = vunpack.c.l.b16 %v993
    %v1026 = vunpack.c.l.b16 %v994
    %v1027 = vunpack.c.l.b16 %v995
    %v1028 = vunpack.c.l.b16 %v996
    %v1029 = vunpack.c.l.b16 %v997
    %v1030 = vunpack.c.l.b16 %v998
    %v1031 = vunpack.c.l.b16 %v999
    %v1032 = vunpack.c.l.b16 %v1000
    %v1033 = vunpack.c.l.b16 %v1001
    %v1034 = vunpack.c.l.b16 %v1002
    %v1035 = vunpack.c.l.b16 %v1003
    %v1036 = vpack.c.b16 %v1021, %v1020
    %v1037 = vpack.c.b16 %v1023, %v1022
    %v1038 = vpack.c.b16 %v1025, %v1024
    %v1039 = vpack.c.b16 %v1027, %v1026
    %v1040 = vpack.c.b16 %v1029, %v1028
    %v1041 = vpack.c.b16 %v1031, %v1030
    %v1042 = vpack.c.b16 %v1033, %v1032
    %v1043 = vpack.c.b16 %v1035, %v1034
    %1052 = vmatpush.bf16.msra.mxu0 %v1043
    %1053 = vmatpush.bf16.msra.mxu0 %v1042
    %1054 = vmatpush.bf16.msra.mxu0 %v1041
    %1055 = vmatpush.bf16.msra.mxu0 %v1040
    %1056 = vmatpush.bf16.msra.mxu0 %v1039
    %1057 = vmatpush.bf16.msra.mxu0 %v1038
    %1058 = vmatpush.bf16.msra.mxu0 %v1037
    %1059 = vmatpush.bf16.msra.mxu0 %v1036
    %1060 = vmatmul.bf16.gmra.mxu0 %v987
    %v1061 = vpop.f32.mrf.mxu0
    %v1062 = vadd.f32 0.0, %v1061
    %v1063 = vpop.f32.mrf.mxu0
    %1064 = vdwg.mxu0
    %v1065 = vmul.f32 %v921, 0.9048374
    %v1066 = vadd.f32 %v1065, %v985
    %v1067 = vadd.f32 %v1066, %v1062
    %v1068 = vtanh.pop %v1067
    %v1069 = vld [vmem:[#allocation9] sm:$0xff]
    %v1070 = vld [vmem:[#allocation9 + $0x8] sm:$0xff]
    %v1071 = vld [vmem:[#allocation9 + $0x10] sm:$0xff]
    %v1072 = vld [vmem:[#allocation9 + $0x18] sm:$0xff]
    %v1073 = vld [vmem:[#allocation9 + $0x20] sm:$0xff]
    %v1074 = vld [vmem:[#allocation9 + $0x28] sm:$0xff]
    %v1075 = vld [vmem:[#allocation9 + $0x30] sm:$0xff]
    %v1076 = vld [vmem:[#allocation9 + $0x38] sm:$0xff]
    %v1077 = vld [vmem:[#allocation9 + $0x40] sm:$0xff]
    %v1078 = vld [vmem:[#allocation9 + $0x48] sm:$0xff]
    %v1079 = vld [vmem:[#allocation9 + $0x50] sm:$0xff]
    %v1080 = vld [vmem:[#allocation9 + $0x58] sm:$0xff]
    %v1081 = vld [vmem:[#allocation9 + $0x60] sm:$0xff]
    %v1082 = vld [vmem:[#allocation9 + $0x68] sm:$0xff]
    %v1083 = vld [vmem:[#allocation9 + $0x70] sm:$0xff]
    %v1084 = vld [vmem:[#allocation9 + $0x78] sm:$0xff]
    %1085 = vmatpush.msra.mxu0 %v1084
    %1086 = vmatpush.msra.mxu0 %v1083
    %1087 = vmatpush.msra.mxu0 %v1082
    %1088 = vmatpush.msra.mxu0 %v1081
    %1089 = vmatpush.msra.mxu0 %v1080
    %1090 = vmatpush.msra.mxu0 %v1079
    %1091 = vmatpush.msra.mxu0 %v1078
    %1092 = vmatpush.msra.mxu0 %v1077
    %1093 = vmatpush.msra.mxu0 %v1076
    %1094 = vmatpush.msra.mxu0 %v1075
    %1095 = vmatpush.msra.mxu0 %v1074
    %1096 = vmatpush.msra.mxu0 %v1073
    %1097 = vmatpush.msra.mxu0 %v1072
    %1098 = vmatpush.msra.mxu0 %v1071
    %1099 = vmatpush.msra.mxu0 %v1070
    %1100 = vmatpush.msra.mxu0 %v1069
    %1101 = vmatmul.f32.gmra.mxu0 %v1068
    %v1102 = vpop.f32.mrf.mxu0
    %v1103 = vadd.f32 0.0, %v1102
    %1104 = vdwg.mxu0
    %s1105 = scalar_lea.vmem [#allocation11], 48
    %1106 = vst [vmem:[%s1105] sm:$0xff] %v1103
    %s1107 = scalar_lea.vmem [#allocation3], 56
    %v1108 = vld [vmem:[%s1107] sm:$0xff]
    %v1109 = vld [vmem:[#allocation6] sm:$0xff]
    %v1111 = vsel %vm88, %v1108, 0
    %1113 = vmatpush.msra.mxu0 0.0
    %1114 = vmatpush.msra.mxu0 0.0
    %1115 = vmatpush.msra.mxu0 0.0
    %1116 = vmatpush.msra.mxu0 0.0
    %1117 = vmatpush.msra.mxu0 0.0
    %1118 = vmatpush.msra.mxu0 0.0
    %1119 = vmatpush.msra.mxu0 0.0
    %1120 = vmatpush.msra.mxu0 0.0
    %1121 = vmatpush.msra.mxu0 0.0
    %1122 = vmatpush.msra.mxu0 0.0
    %1123 = vmatpush.msra.mxu0 0.0
    %1124 = vmatpush.msra.mxu0 0.0
    %1125 = vmatpush.msra.mxu0 0.0
    %1126 = vmatpush.msra.mxu0 0.0
    %1127 = vmatpush.msra.mxu0 0.0
    %1128 = vmatpush.msra.mxu0 %v1109
    %1129 = vmatmul.f32.gmra.mxu0 %v1111
    %v1130 = vpop.f32.mrf.mxu0
    %v1131 = vadd.f32 0.0, %v1130
    %1132 = vdwg.mxu0
    %v1133 = vpack.c.bf16 %v1068, %v1068
    %v1134 = vld [vmem:[#allocation8] sm:$0xf]
    %v1135 = vld [vmem:[#allocation8 + $0x4] sm:$0xf]
    %v1136 = vld [vmem:[#allocation8 + $0x8] sm:$0xf]
    %v1137 = vld [vmem:[#allocation8 + $0xc] sm:$0xf]
    %v1138 = vld [vmem:[#allocation8 + $0x10] sm:$0xf]
    %v1139 = vld [vmem:[#allocation8 + $0x14] sm:$0xf]
    %v1140 = vld [vmem:[#allocation8 + $0x18] sm:$0xf]
    %v1141 = vld [vmem:[#allocation8 + $0x1c] sm:$0xf]
    %v1142 = vld [vmem:[#allocation8 + $0x20] sm:$0xf]
    %v1143 = vld [vmem:[#allocation8 + $0x24] sm:$0xf]
    %v1144 = vld [vmem:[#allocation8 + $0x28] sm:$0xf]
    %v1145 = vld [vmem:[#allocation8 + $0x2c] sm:$0xf]
    %v1146 = vld [vmem:[#allocation8 + $0x30] sm:$0xf]
    %v1147 = vld [vmem:[#allocation8 + $0x34] sm:$0xf]
    %v1148 = vld [vmem:[#allocation8 + $0x38] sm:$0xf]
    %v1149 = vld [vmem:[#allocation8 + $0x3c] sm:$0xf]
    %v1166 = vunpack.c.l.b16 %v1134
    %v1167 = vunpack.c.l.b16 %v1135
    %v1168 = vunpack.c.l.b16 %v1136
    %v1169 = vunpack.c.l.b16 %v1137
    %v1170 = vunpack.c.l.b16 %v1138
    %v1171 = vunpack.c.l.b16 %v1139
    %v1172 = vunpack.c.l.b16 %v1140
    %v1173 = vunpack.c.l.b16 %v1141
    %v1174 = vunpack.c.l.b16 %v1142
    %v1175 = vunpack.c.l.b16 %v1143
    %v1176 = vunpack.c.l.b16 %v1144
    %v1177 = vunpack.c.l.b16 %v1145
    %v1178 = vunpack.c.l.b16 %v1146
    %v1179 = vunpack.c.l.b16 %v1147
    %v1180 = vunpack.c.l.b16 %v1148
    %v1181 = vunpack.c.l.b16 %v1149
    %v1182 = vpack.c.b16 %v1167, %v1166
    %v1183 = vpack.c.b16 %v1169, %v1168
    %v1184 = vpack.c.b16 %v1171, %v1170
    %v1185 = vpack.c.b16 %v1173, %v1172
    %v1186 = vpack.c.b16 %v1175, %v1174
    %v1187 = vpack.c.b16 %v1177, %v1176
    %v1188 = vpack.c.b16 %v1179, %v1178
    %v1189 = vpack.c.b16 %v1181, %v1180
    %1198 = vmatpush.bf16.msra.mxu0 %v1189
    %1199 = vmatpush.bf16.msra.mxu0 %v1188
    %1200 = vmatpush.bf16.msra.mxu0 %v1187
    %1201 = vmatpush.bf16.msra.mxu0 %v1186
    %1202 = vmatpush.bf16.msra.mxu0 %v1185
    %1203 = vmatpush.bf16.msra.mxu0 %v1184
    %1204 = vmatpush.bf16.msra.mxu0 %v1183
    %1205 = vmatpush.bf16.msra.mxu0 %v1182
    %1206 = vmatmul.bf16.gmra.mxu0 %v1133
    %v1207 = vpop.f32.mrf.mxu0
    %v1208 = vadd.f32 0.0, %v1207
    %v1209 = vpop.f32.mrf.mxu0
    %1210 = vdwg.mxu0
    %v1211 = vmul.f32 %v1067, 0.9048374
    %v1212 = vadd.f32 %v1211, %v1131
    %v1213 = vadd.f32 %v1212, %v1208
    %v1214 = vtanh.pop %v1213
    %v1215 = vld [vmem:[#allocation9] sm:$0xff]
    %v1216 = vld [vmem:[#allocation9 + $0x8] sm:$0xff]
    %v1217 = vld [vmem:[#allocation9 + $0x10] sm:$0xff]
    %v1218 = vld [vmem:[#allocation9 + $0x18] sm:$0xff]
    %v1219 = vld [vmem:[#allocation9 + $0x20] sm:$0xff]
    %v1220 = vld [vmem:[#allocation9 + $0x28] sm:$0xff]
    %v1221 = vld [vmem:[#allocation9 + $0x30] sm:$0xff]
    %v1222 = vld [vmem:[#allocation9 + $0x38] sm:$0xff]
    %v1223 = vld [vmem:[#allocation9 + $0x40] sm:$0xff]
    %v1224 = vld [vmem:[#allocation9 + $0x48] sm:$0xff]
    %v1225 = vld [vmem:[#allocation9 + $0x50] sm:$0xff]
    %v1226 = vld [vmem:[#allocation9 + $0x58] sm:$0xff]
    %v1227 = vld [vmem:[#allocation9 + $0x60] sm:$0xff]
    %v1228 = vld [vmem:[#allocation9 + $0x68] sm:$0xff]
    %v1229 = vld [vmem:[#allocation9 + $0x70] sm:$0xff]
    %v1230 = vld [vmem:[#allocation9 + $0x78] sm:$0xff]
    %1231 = vmatpush.msra.mxu0 %v1230
    %1232 = vmatpush.msra.mxu0 %v1229
    %1233 = vmatpush.msra.mxu0 %v1228
    %1234 = vmatpush.msra.mxu0 %v1227
    %1235 = vmatpush.msra.mxu0 %v1226
    %1236 = vmatpush.msra.mxu0 %v1225
    %1237 = vmatpush.msra.mxu0 %v1224
    %1238 = vmatpush.msra.mxu0 %v1223
    %1239 = vmatpush.msra.mxu0 %v1222
    %1240 = vmatpush.msra.mxu0 %v1221
    %1241 = vmatpush.msra.mxu0 %v1220
    %1242 = vmatpush.msra.mxu0 %v1219
    %1243 = vmatpush.msra.mxu0 %v1218
    %1244 = vmatpush.msra.mxu0 %v1217
    %1245 = vmatpush.msra.mxu0 %v1216
    %1246 = vmatpush.msra.mxu0 %v1215
    %1247 = vmatmul.f32.gmra.mxu0 %v1214
    %v1248 = vpop.f32.mrf.mxu0
    %v1249 = vadd.f32 0.0, %v1248
    %1250 = vdwg.mxu0
    %s1251 = scalar_lea.vmem [#allocation11], 56
    %1252 = vst [vmem:[%s1251] sm:$0xff] %v1249
    %1253 = vst [vmem:[#allocation2] sm:$0xff] %v1213
    // Predicated region
    $region38: #{tpu_custom_call.1} parent=1 // pred_check
      _
    $region39: #{tpu_custom_call.1} parent=1 // pred_check_branch
      %1255 = sbr.rel (0) target = $region41
    $region40: #{tpu_custom_call.1} parent=1 // pred_region
      %1257 = vsyncadd [#allocation5], 0
      %s1258 = sshll.u32 [#allocation11], 4
      %s1259 = int_to_ptr.vmem [resolvable:$true] %s1258
      %s1260 = sshll.u32 %s4, 4
      %s1261 = int_to_ptr.hbm [resolvable:$true] %s1260
      %1266 = dma.vmem_to_hbm [thread:$0]  %s1259, 1024, %s1261, [#allocation5], 128, 128, 8
    $region41: #{tpu_custom_call.1} parent=1 // pred_fallthru
      _
    // Predicated region
    $region42: #{tpu_custom_call.1} parent=1 // pred_check
      _
    $region43: #{tpu_custom_call.1} parent=1 // pred_check_branch
      %1268 = sbr.rel (0) target = $region45
    $region44: #{tpu_custom_call.1} parent=1 // pred_region
      %1270 = dma.done [#allocation5], 1024
    $region45: #{tpu_custom_call.1} parent=1 // pred_fallthru
      _
    %1271 = vsyncpa [#allocation4], 1
    %1272 = vsyncpa [#allocation7], 1
    %1273 = vsyncpa [#allocation10], 1
    %1274 = vsyncpa [#allocation5], 1

</llo_original>
